<compile_context>
chip_gen: v5e
topology: v5e:2x2
jax: 0.10.0
libtpu: 0.0.40
codegen_flags: <defaults>
</compile_context>

<pallas_src>
import functools

import numpy as np
import jax
import jax.numpy as jnp
from jax import lax
from jax.experimental import pallas as pl
from jax.experimental.pallas import tpu as pltpu


def addbottleneck_kernel(x_ref, mask_ref, w1_ref, w2_ref, w3_ref, b_ref, out_ref,
                         *, wp, c2, c4, c4p, im2col):
    # x_ref   : (cin, B*L)     B zero-padded images, flattened row-major; per-image lane
    #                          stride L, row stride wp inside an image.
    # mask_ref: (2, B*L)       row 0: interior of each padded image; row 1: valid conv2
    #                          output positions (both 1.0/0.0, precomputed host-side).
    # w1_ref  : (c2, cin)      1x1 conv weight (BN folded), (out, in).
    # w2_ref  : (c4p, 9*c2)    im2col form   |  (9, c4, c2) accumulate form.
    # w3_ref  : (c4, 9*c4p)    im2col form   |  (9, c4, c4) accumulate form.
    # b_ref   : (c2+c4p+c4, 1) folded biases [b1; b2 (padded to c4p); b3].
    # out_ref : (cout, Wout)   Wout % 128 == 0; pixel (i, j) of folded image b sits at
    #                          lane b*L + i*wp + j (extra lanes are cropped in the wrapper).
    f32 = jnp.float32
    Wout = out_ref.shape[1]
    W1 = Wout + 2 * wp + 2           # conv2-output width that conv3's taps need
    o0 = 2 * wp + 2                  # lane offset of pixel (0, 0) on the padded grid
    offs = [dh * wp + dw for dh in range(3) for dw in range(3)]
    mm = w1_ref.dtype                # MXU operand dtype (f32 by default, bf16 if enabled)

    xf = x_ref[...]                                               # (cin, BL)
    m0 = mask_ref[0:1, :]                                         # (1, BL)
    m1 = mask_ref[1:2, :W1]                                       # (1, W1)

    # conv_list[0]: 1x1 ConvBNReLU -> one MXU matmul over the whole padded slab.
    y0 = jnp.maximum(
        jnp.dot(w1_ref[...], xf.astype(mm), preferred_element_type=f32)
        + b_ref[0:c2, :], 0.0)
    y0p = y0 * m0          # zero the halo so it becomes the 'same' zero padding of conv2

    def conv3x3(src, wref, bias, width):
        if im2col:         # one K = 9*ci matmul (v5e/v6e: single MXU weight push / pop)
            cols = jnp.concatenate([src[:, o:o + width] for o in offs], axis=0)
            acc = jnp.dot(wref[...], cols.astype(mm), preferred_element_type=f32)
        else:              # 9 accumulated matmuls (v7x: MRB accumulates in place and the
            ci = wref.shape[2]                      # 9x im2col buffer is never built)
            acc = jnp.zeros((wref.shape[1], width), f32)
            for t, o in enumerate(offs):
                acc = acc + jnp.dot(wref[t], src[0:ci, o:o + width].astype(mm),
                                    preferred_element_type=f32)
        return jnp.maximum(acc + bias, 0.0)

    # conv_list[1]: 3x3 ConvBNReLU (out rows padded to c4p so the im2col concats stay
    # 8-sublane aligned); mask makes it the zero 'same' padding for conv_list[2].
    y1p = conv3x3(y0p, w2_ref, b_ref[c2:c2 + c4p, :], W1) * m1
    # conv_list[2]: 3x3 ConvBNReLU.
    y2 = conv3x3(y1p, w3_ref, b_ref[c2 + c4p:c2 + c4p + c4, :], Wout)

    # torch.concat(out_list, dim=1) + x : slice the residual once, write one aligned
    # lane-dense (cout, Wout) store.
    xr = xf[:, o0:o0 + Wout]
    out_ref[...] = jnp.concatenate(
        [y0p[:, o0:o0 + Wout],
         y1p[0:c4, wp + 1:wp + 1 + Wout],
         y2], axis=0) + xr


def add_bottleneck(x, p1, p2, p3, *, images_per_step=None, matmul_dtype=jnp.float32):
    """x: (N, Cin, H, W) float32 (NCHW).  p* = folded (HWIO weight, bias) per ConvBNReLU."""
    n, cin, h, w = x.shape
    w1, b1 = p1                     # (1, 1, Cin, C2), (C2,)
    w2, b2 = p2                     # (3, 3, C2, C4),  (C4,)
    w3, b3 = p3                     # (3, 3, C4, C4),  (C4,)
    c2, c4 = w1.shape[-1], w2.shape[-1]
    cout = c2 + 2 * c4
    assert cin == cout, "stride=1 AddBottleneck needs in_planes == out_planes"

    wp = w + 4                      # padded width == flat-grid row stride
    Lo = h * wp                     # per-image valid output length on the flat grid
    o0 = 2 * wp + 2                 # flat offset of pixel (0, 0) on the padded grid

    # --- how many images to fold into the lane axis of one grid step --------------------
    if images_per_step is None:
        L_est = (h + 6) * wp
        B = 1
        for cand in range(1, n + 1):
            if n % cand or cand * L_est > 16384:
                continue
            if n // cand >= 2 or n == 1:   # keep >=2 grid steps so both v7x TCs get work
                B = cand
    else:
        B = images_per_step
    assert n % B == 0
    G = n // B
    # TODO(synk): when n == 1 on v7x, additionally split the image into two row strips so
    # the second TensorCore is not idle.

    # --- pick the per-image padded length so the output slab is 128-lane aligned --------
    hp = h + 3
    while True:
        L = hp * wp
        Wout = -(-((B - 1) * L + Lo) // 128) * 128     # output lanes, multiple of 128
        if Wout + 4 * wp + 4 <= B * L:                 # all shifted slices stay in bounds
            break
        hp += 1
    BL = B * L
    W1 = Wout + 2 * wp + 2

    # --- which conv3x3 form to use (per generation) --------------------------------------
    try:
        kind = jax.devices()[0].device_kind.lower()
    except Exception:
        kind = ""
    is_v7 = ("v7" in kind) or ("tpu7" in kind) or ("7x" in kind)
    use_im2col = not is_v7          # v5e/v6e: single K=9*ci matmul; v7x: 9 accumulated

    # --- glue (plain JAX, one-time): pad + flatten + fold batch into lanes ---------------
    xp = jnp.pad(x, ((0, 0), (0, 0), (2, hp - h - 2), (2, 2))).reshape(n, cin, L)
    xg = xp.reshape(G, B, cin, L).transpose(0, 2, 1, 3).reshape(G, cin, BL)

    # Halo masks, built host-side with exact integer arithmetic (no in-kernel iota/floor).
    rr = np.arange(L) // wp
    cc = np.arange(L) % wp
    m0 = (rr >= 2) & (rr < 2 + h) & (cc >= 2) & (cc < 2 + w)     # interior of padded image
    m1 = (rr >= 1) & (rr < 1 + h) & (cc >= 1) & (cc < 1 + w)     # valid conv2 outputs
    mask = jnp.asarray(np.stack([np.tile(m0, B), np.tile(m1, B)]).astype(np.float32))

    w1k = w1.reshape(cin, c2).T.astype(matmul_dtype)             # (c2, cin)
    if use_im2col:
        c4p = max(8, -(-c4 // 8) * 8)                            # conv2 out rows, 8-aligned
        w2k = jnp.zeros((c4p, 9 * c2), jnp.float32).at[:c4].set(w2.reshape(9 * c2, c4).T)
        w3k = jnp.zeros((c4, 9, c4p), jnp.float32).at[:, :, :c4].set(
            jnp.transpose(w3.reshape(9, c4, c4), (2, 0, 1))).reshape(c4, 9 * c4p)
        w2_spec = pl.BlockSpec((c4p, 9 * c2), lambda i: (0, 0))
        w3_spec = pl.BlockSpec((c4, 9 * c4p), lambda i: (0, 0))
    else:
        c4p = c4
        w2k = jnp.transpose(w2.reshape(9, c2, c4), (0, 2, 1))    # (9, co, ci)
        w3k = jnp.transpose(w3.reshape(9, c4, c4), (0, 2, 1))    # (9, co, ci)
        w2_spec = pl.BlockSpec((9, c4, c2), lambda i: (0, 0, 0))
        w3_spec = pl.BlockSpec((9, c4, c4), lambda i: (0, 0, 0))
    w2k = w2k.astype(matmul_dtype)
    w3k = w3k.astype(matmul_dtype)

    b2p = jnp.concatenate([b2, jnp.zeros((c4p - c4,), jnp.float32)]) if c4p > c4 else b2
    ball = jnp.concatenate([b1, b2p, b3]).reshape(c2 + c4p + c4, 1)

    # --- raise the scoped-VMEM limit only when the working set needs it ------------------
    est = 4 * (2 * cin * BL + 2 * cout * Wout + 2 * BL
               + (2 * c2 + 9 * c2 + 2 * c4p) * BL
               + (9 * c4p + 2 * c4 + cout) * Wout)
    vmem_limit = int(min(64 * 2 ** 20, 2 * est)) if est > 12 * 2 ** 20 else None

    kernel = functools.partial(addbottleneck_kernel, wp=wp, c2=c2, c4=c4, c4p=c4p,
                               im2col=use_im2col)
    out_flat = pl.pallas_call(
        kernel,
        out_shape=jax.ShapeDtypeStruct((G, cout, Wout), jnp.float32),
        grid=(G,),
        in_specs=[
            pl.BlockSpec((None, cin, BL), lambda i: (i, 0, 0)),
            pl.BlockSpec((2, BL), lambda i: (0, 0)),
            pl.BlockSpec((c2, cin), lambda i: (0, 0)),
            w2_spec,
            w3_spec,
            pl.BlockSpec((c2 + c4p + c4, 1), lambda i: (0, 0)),
        ],
        out_specs=pl.BlockSpec((None, cout, Wout), lambda i: (i, 0, 0)),
        compiler_params=pltpu.CompilerParams(
            dimension_semantics=("parallel",),      # independent image groups
            vmem_limit_bytes=vmem_limit),
    )(xg, mask, w1k, w2k, w3k, ball)

    # Unfold the lane axis back to NCHW and drop the alignment padding.
    out = jnp.pad(out_flat, ((0, 0), (0, 0), (0, BL - Wout)))
    out = out.reshape(G, cout, B, L).transpose(0, 2, 1, 3).reshape(n, cout, L)
    return out[:, :, :Lo].reshape(n, cout, h, wp)[:, :, :, :w]


def init_convbnrelu_folded(key, cin, cout, ksize):
    """Deterministic Conv2d(bias=False) + BatchNorm2d params, BN folded (eval mode)."""
    kw, kg, kb, km, kv = jax.random.split(key, 5)
    fan_in = float(cin * ksize * ksize)
    wconv = jax.random.normal(kw, (ksize, ksize, cin, cout), jnp.float32) / np.sqrt(fan_in)
    gamma = 1.0 + 0.1 * jax.random.normal(kg, (cout,), jnp.float32)
    beta = 0.1 * jax.random.normal(kb, (cout,), jnp.float32)
    mean = 0.1 * jax.random.normal(km, (cout,), jnp.float32)
    var = 0.5 + jax.random.uniform(kv, (cout,), jnp.float32)
    scale = gamma / jnp.sqrt(var + 1e-5)
    return (wconv * scale).astype(jnp.float32), (beta - mean * scale).astype(jnp.float32)


def reference_forward(x, p1, p2, p3):
    """Plain-JAX reference of AddBottleneck.forward (stride=1, block_num=3), NCHW."""
    def cbr(v, wgt, b):
        y = lax.conv_general_dilated(
            v, wgt, window_strides=(1, 1), padding="SAME",
            dimension_numbers=("NCHW", "HWIO", "NCHW"),
            precision=lax.Precision.HIGHEST)
        return jax.nn.relu(y + b.reshape(1, -1, 1, 1))
    y0 = cbr(x, *p1)
    y1 = cbr(y0, *p2)
    y2 = cbr(y1, *p3)
    return jnp.concatenate([y0, y1, y2], axis=1) + x


if __name__ == "__main__":
    key = jax.random.PRNGKey(0)
    kx, k1, k2, k3 = jax.random.split(key, 4)

    N, H, W = 4, 16, 16            # N=4 -> 2 grid steps, 2 images folded per step
    in_planes = out_planes = 16
    c2, c4 = out_planes // 2, out_planes // 4

    x = jax.random.normal(kx, (N, in_planes, H, W), jnp.float32)   # NCHW, like PyTorch
    p1 = init_convbnrelu_folded(k1, in_planes, c2, 1)
    p2 = init_convbnrelu_folded(k2, c2, c4, 3)
    p3 = init_convbnrelu_folded(k3, c4, c4, 3)

    out = jax.block_until_ready(add_bottleneck(x, p1, p2, p3))
    ref = reference_forward(x, p1, p2, p3)
    np.testing.assert_allclose(np.asarray(out), np.asarray(ref), rtol=1e-3, atol=1e-3)
    print("KERNEL_OK")
</pallas_src>

<mosaic_0001>
module attributes {stable_mosaic.version = 11 : i64} {
  func.func @addbottleneck_kernel(%arg0: i32, %arg1: memref<1x16x880xf32, #tpu.memory_space<vmem>>, %arg2: memref<2x880xf32, #tpu.memory_space<vmem>>, %arg3: memref<8x16xf32, #tpu.memory_space<vmem>>, %arg4: memref<8x72xf32, #tpu.memory_space<vmem>>, %arg5: memref<4x72xf32, #tpu.memory_space<vmem>>, %arg6: memref<20x1xf32, #tpu.memory_space<vmem>>, %arg7: memref<1x16x768xf32, #tpu.memory_space<vmem>>) attributes {dimension_semantics = [#tpu.dimension_semantics<parallel>], iteration_bounds = array<i64: 2>, scalar_prefetch = 0 : i64, scratch_operands = 0 : i64, tpu.core_type = #tpu.core_type<tc>, window_params = [{transform_indices = @transform_0, window_bounds = array<i64: 1, 16, 880>}, {pipeline_mode = #tpu.pipeline_mode<synchronous>, transform_indices = @transform_1, window_bounds = array<i64: 2, 880>}, {pipeline_mode = #tpu.pipeline_mode<synchronous>, transform_indices = @transform_2, window_bounds = array<i64: 8, 16>}, {pipeline_mode = #tpu.pipeline_mode<synchronous>, transform_indices = @transform_3, window_bounds = array<i64: 8, 72>}, {pipeline_mode = #tpu.pipeline_mode<synchronous>, transform_indices = @transform_4, window_bounds = array<i64: 4, 72>}, {pipeline_mode = #tpu.pipeline_mode<synchronous>, transform_indices = @transform_5, window_bounds = array<i64: 20, 1>}, {transform_indices = @transform_6, window_bounds = array<i64: 1, 16, 768>}]} {
    %c0 = arith.constant 0 : index
    %c0_0 = arith.constant 0 : index
    %c0_1 = arith.constant 0 : index
    %0 = vector.load %arg1[%c0, %c0_0, %c0_1] : memref<1x16x880xf32, #tpu.memory_space<vmem>>, vector<1x16x880xf32>
    %1 = vector.shape_cast %0 : vector<1x16x880xf32> to vector<16x880xf32>
    %c0_2 = arith.constant 0 : index
    %c0_3 = arith.constant 0 : index
    %2 = vector.load %arg2[%c0_2, %c0_3] : memref<2x880xf32, #tpu.memory_space<vmem>>, vector<1x880xf32>
    %c1 = arith.constant 1 : index
    %c0_4 = arith.constant 0 : index
    %3 = vector.load %arg2[%c1, %c0_4] : memref<2x880xf32, #tpu.memory_space<vmem>>, vector<1x810xf32>
    %c0_5 = arith.constant 0 : index
    %c0_6 = arith.constant 0 : index
    %4 = vector.load %arg3[%c0_5, %c0_6] : memref<8x16xf32, #tpu.memory_space<vmem>>, vector<8x16xf32>
    %cst = arith.constant dense<0.000000e+00> : vector<8x880xf32>
    %5 = tpu.matmul %4, %1, %cst {dimension_numbers = #tpu.dot_dimension_numbers<[1], [0], [0], [1], [0, 0, 1, 1], [], []>} : vector<8x16xf32>, vector<16x880xf32>, vector<8x880xf32> -> vector<8x880xf32>
    %c0_7 = arith.constant 0 : index
    %c0_8 = arith.constant 0 : index
    %6 = vector.load %arg6[%c0_7, %c0_8] : memref<20x1xf32, #tpu.memory_space<vmem>>, vector<8x1xf32>
    %7 = vector.broadcast %6 : vector<8x1xf32> to vector<8x880xf32>
    %8 = arith.addf %5, %7 : vector<8x880xf32>
    %cst_9 = arith.constant 0.000000e+00 : f32
    %9 = vector.broadcast %cst_9 : f32 to vector<8x880xf32>
    %10 = arith.maximumf %8, %9 : vector<8x880xf32>
    %11 = vector.broadcast %2 : vector<1x880xf32> to vector<8x880xf32>
    %12 = arith.mulf %10, %11 : vector<8x880xf32>
    %c8 = arith.constant 8 : index
    %c0_10 = arith.constant 0 : index
    %13 = vector.load %arg6[%c8, %c0_10] : memref<20x1xf32, #tpu.memory_space<vmem>>, vector<8x1xf32>
    %14 = vector.extract_strided_slice %12 {offsets = [0, 0], sizes = [8, 810], strides = [1, 1]} : vector<8x880xf32> to vector<8x810xf32>
    %15 = vector.extract_strided_slice %12 {offsets = [0, 1], sizes = [8, 810], strides = [1, 1]} : vector<8x880xf32> to vector<8x810xf32>
    %16 = vector.extract_strided_slice %12 {offsets = [0, 2], sizes = [8, 810], strides = [1, 1]} : vector<8x880xf32> to vector<8x810xf32>
    %17 = vector.extract_strided_slice %12 {offsets = [0, 20], sizes = [8, 810], strides = [1, 1]} : vector<8x880xf32> to vector<8x810xf32>
    %18 = vector.extract_strided_slice %12 {offsets = [0, 21], sizes = [8, 810], strides = [1, 1]} : vector<8x880xf32> to vector<8x810xf32>
    %19 = vector.extract_strided_slice %12 {offsets = [0, 22], sizes = [8, 810], strides = [1, 1]} : vector<8x880xf32> to vector<8x810xf32>
    %20 = vector.extract_strided_slice %12 {offsets = [0, 40], sizes = [8, 810], strides = [1, 1]} : vector<8x880xf32> to vector<8x810xf32>
    %21 = vector.extract_strided_slice %12 {offsets = [0, 41], sizes = [8, 810], strides = [1, 1]} : vector<8x880xf32> to vector<8x810xf32>
    %22 = vector.extract_strided_slice %12 {offsets = [0, 42], sizes = [8, 810], strides = [1, 1]} : vector<8x880xf32> to vector<8x810xf32>
    %23 = tpu.concatenate %14, %15, %16, %17, %18, %19, %20, %21, %22 in 0 : vector<8x810xf32>, vector<8x810xf32>, vector<8x810xf32>, vector<8x810xf32>, vector<8x810xf32>, vector<8x810xf32>, vector<8x810xf32>, vector<8x810xf32>, vector<8x810xf32> -> vector<72x810xf32>
    %c0_11 = arith.constant 0 : index
    %c0_12 = arith.constant 0 : index
    %24 = vector.load %arg4[%c0_11, %c0_12] : memref<8x72xf32, #tpu.memory_space<vmem>>, vector<8x72xf32>
    %cst_13 = arith.constant dense<0.000000e+00> : vector<8x810xf32>
    %25 = tpu.matmul %24, %23, %cst_13 {dimension_numbers = #tpu.dot_dimension_numbers<[1], [0], [0], [1], [0, 0, 1, 1], [], []>} : vector<8x72xf32>, vector<72x810xf32>, vector<8x810xf32> -> vector<8x810xf32>
    %26 = vector.broadcast %13 : vector<8x1xf32> to vector<8x810xf32>
    %27 = arith.addf %25, %26 : vector<8x810xf32>
    %cst_14 = arith.constant 0.000000e+00 : f32
    %28 = vector.broadcast %cst_14 : f32 to vector<8x810xf32>
    %29 = arith.maximumf %27, %28 : vector<8x810xf32>
    %30 = vector.broadcast %3 : vector<1x810xf32> to vector<8x810xf32>
    %31 = arith.mulf %29, %30 : vector<8x810xf32>
    %c16 = arith.constant 16 : index
    %c0_15 = arith.constant 0 : index
    %32 = vector.load %arg6[%c16, %c0_15] : memref<20x1xf32, #tpu.memory_space<vmem>>, vector<4x1xf32>
    %33 = vector.extract_strided_slice %31 {offsets = [0, 0], sizes = [8, 768], strides = [1, 1]} : vector<8x810xf32> to vector<8x768xf32>
    %34 = vector.extract_strided_slice %31 {offsets = [0, 1], sizes = [8, 768], strides = [1, 1]} : vector<8x810xf32> to vector<8x768xf32>
    %35 = vector.extract_strided_slice %31 {offsets = [0, 2], sizes = [8, 768], strides = [1, 1]} : vector<8x810xf32> to vector<8x768xf32>
    %36 = vector.extract_strided_slice %31 {offsets = [0, 20], sizes = [8, 768], strides = [1, 1]} : vector<8x810xf32> to vector<8x768xf32>
    %37 = vector.extract_strided_slice %31 {offsets = [0, 21], sizes = [8, 768], strides = [1, 1]} : vector<8x810xf32> to vector<8x768xf32>
    %38 = vector.extract_strided_slice %31 {offsets = [0, 22], sizes = [8, 768], strides = [1, 1]} : vector<8x810xf32> to vector<8x768xf32>
    %39 = vector.extract_strided_slice %31 {offsets = [0, 40], sizes = [8, 768], strides = [1, 1]} : vector<8x810xf32> to vector<8x768xf32>
    %40 = vector.extract_strided_slice %31 {offsets = [0, 41], sizes = [8, 768], strides = [1, 1]} : vector<8x810xf32> to vector<8x768xf32>
    %41 = vector.extract_strided_slice %31 {offsets = [0, 42], sizes = [8, 768], strides = [1, 1]} : vector<8x810xf32> to vector<8x768xf32>
    %42 = tpu.concatenate %33, %34, %35, %36, %37, %38, %39, %40, %41 in 0 : vector<8x768xf32>, vector<8x768xf32>, vector<8x768xf32>, vector<8x768xf32>, vector<8x768xf32>, vector<8x768xf32>, vector<8x768xf32>, vector<8x768xf32>, vector<8x768xf32> -> vector<72x768xf32>
    %c0_16 = arith.constant 0 : index
    %c0_17 = arith.constant 0 : index
    %43 = vector.load %arg5[%c0_16, %c0_17] : memref<4x72xf32, #tpu.memory_space<vmem>>, vector<4x72xf32>
    %cst_18 = arith.constant dense<0.000000e+00> : vector<4x768xf32>
    %44 = tpu.matmul %43, %42, %cst_18 {dimension_numbers = #tpu.dot_dimension_numbers<[1], [0], [0], [1], [0, 0, 1, 1], [], []>} : vector<4x72xf32>, vector<72x768xf32>, vector<4x768xf32> -> vector<4x768xf32>
    %45 = vector.broadcast %32 : vector<4x1xf32> to vector<4x768xf32>
    %46 = arith.addf %44, %45 : vector<4x768xf32>
    %cst_19 = arith.constant 0.000000e+00 : f32
    %47 = vector.broadcast %cst_19 : f32 to vector<4x768xf32>
    %48 = arith.maximumf %46, %47 : vector<4x768xf32>
    %49 = vector.extract_strided_slice %1 {offsets = [0, 42], sizes = [16, 768], strides = [1, 1]} : vector<16x880xf32> to vector<16x768xf32>
    %50 = vector.extract_strided_slice %12 {offsets = [0, 42], sizes = [8, 768], strides = [1, 1]} : vector<8x880xf32> to vector<8x768xf32>
    %51 = vector.extract_strided_slice %31 {offsets = [0, 21], sizes = [4, 768], strides = [1, 1]} : vector<8x810xf32> to vector<4x768xf32>
    %52 = tpu.concatenate %50, %51, %48 in 0 : vector<8x768xf32>, vector<4x768xf32>, vector<4x768xf32> -> vector<16x768xf32>
    %53 = arith.addf %52, %49 : vector<16x768xf32>
    %c0_20 = arith.constant 0 : index
    %c0_21 = arith.constant 0 : index
    %c0_22 = arith.constant 0 : index
    %54 = vector.load %arg7[%c0_20, %c0_21, %c0_22] : memref<1x16x768xf32, #tpu.memory_space<vmem>>, vector<1x16x768xf32>
    %55 = vector.shape_cast %54 : vector<1x16x768xf32> to vector<16x768xf32>
    %56 = vector.shape_cast %53 : vector<16x768xf32> to vector<1x16x768xf32>
    tpu.vector_store %arg7[%c0_20, %c0_21, %c0_22], %56 {strides = array<i32>} : memref<1x16x768xf32, #tpu.memory_space<vmem>>, vector<1x16x768xf32>,
    return
  }
  func.func @transform_0(%arg0: i32) -> (i32, i32, i32) {
    %c0_i32 = arith.constant 0 : i32
    %c0_i32_0 = arith.constant 0 : i32
    %c0_i32_1 = arith.constant 0 : i32
    return %arg0, %c0_i32, %c0_i32_0 : i32, i32, i32
  }
  func.func @transform_1(%arg0: i32) -> (i32, i32) {
    %c0_i32 = arith.constant 0 : i32
    %c0_i32_0 = arith.constant 0 : i32
    %c0_i32_1 = arith.constant 0 : i32
    return %c0_i32, %c0_i32_0 : i32, i32
  }
  func.func @transform_2(%arg0: i32) -> (i32, i32) {
    %c0_i32 = arith.constant 0 : i32
    %c0_i32_0 = arith.constant 0 : i32
    %c0_i32_1 = arith.constant 0 : i32
    return %c0_i32, %c0_i32_0 : i32, i32
  }
  func.func @transform_3(%arg0: i32) -> (i32, i32) {
    %c0_i32 = arith.constant 0 : i32
    %c0_i32_0 = arith.constant 0 : i32
    %c0_i32_1 = arith.constant 0 : i32
    return %c0_i32, %c0_i32_0 : i32, i32
  }
  func.func @transform_4(%arg0: i32) -> (i32, i32) {
    %c0_i32 = arith.constant 0 : i32
    %c0_i32_0 = arith.constant 0 : i32
    %c0_i32_1 = arith.constant 0 : i32
    return %c0_i32, %c0_i32_0 : i32, i32
  }
  func.func @transform_5(%arg0: i32) -> (i32, i32) {
    %c0_i32 = arith.constant 0 : i32
    %c0_i32_0 = arith.constant 0 : i32
    %c0_i32_1 = arith.constant 0 : i32
    return %c0_i32, %c0_i32_0 : i32, i32
  }
  func.func @transform_6(%arg0: i32) -> (i32, i32, i32) {
    %c0_i32 = arith.constant 0 : i32
    %c0_i32_0 = arith.constant 0 : i32
    %c0_i32_1 = arith.constant 0 : i32
    return %arg0, %c0_i32, %c0_i32_0 : i32, i32, i32
  }
}

</mosaic_0001>

<llo_original>
// kernel: tpu_custom_call.1
$region0: #{tpu_custom_call.1}
  #allocation0 [shape = 'u32[]', space=smem, size = 0x4, offset = 0x4, fixed_abs, tag = 'smem constant byte address 0x4 - core index']
  #allocation1 [shape = 'u32[72,128]{1,0:T(1,128)}', space=vmem, size = 0x9000, scoped, tag = 'internal scratch']
  %s0 = inlined_call_operand.hbm [shape: f32[2,16,880], index: 0, kind: input, shape index: {}]
  %s1 = inlined_call_operand.vmem [shape: f32[2,880], index: 1, kind: input, shape index: {}]
  %s2 = inlined_call_operand.vmem [shape: f32[8,16], index: 2, kind: input, shape index: {}]
  %s3 = inlined_call_operand.hbm [shape: f32[8,72], index: 3, kind: input, shape index: {}]
  %s4 = inlined_call_operand.hbm [shape: f32[4,72], index: 4, kind: input, shape index: {}]
  %s5 = inlined_call_operand.vmem [shape: f32[20,1], index: 5, kind: input, shape index: {}]
  %s6 = inlined_call_operand.hbm [shape: f32[2,16,768], index: 6, kind: output, shape index: {}]
  %s7 = sld [smem:[#allocation0]]
  $region69: #{tpu_custom_call.1} parent=0
    _
  %s9 = ssub.s32 1, %s7
  %s10 = scalar_select 0, %s9, %s7
  $region1: #{tpu_custom_call.1} parent=0
    #allocation2 [shape = 'u8[114688]{0}', space=vmem, size = 0x1c000, scoped, tag = 'input window, operand 0']
    #allocation3 [shape = 's32[2]{0}', space=sflag, size = 0x8, scoped, tag = 'scoped memory for tpu_custom_call.1']
    #allocation4 [shape = 's32[2]{0}', space=sflag, size = 0x8, scoped, tag = 'scoped memory for tpu_custom_call.1']
    #allocation5 [shape = 'u8[4096]{0}', space=vmem, size = 0x1000, scoped, tag = 'input window, operand 3, single buffered']
    #allocation6 [shape = 's32[1]{0}', space=sflag, size = 0x4, scoped, tag = 'scoped memory for tpu_custom_call.1']
    #allocation7 [shape = 'u8[2048]{0}', space=vmem, size = 0x800, scoped, tag = 'input window, operand 4, single buffered']
    #allocation8 [shape = 'u8[98304]{0}', space=vmem, size = 0x18000, scoped, tag = 'output window, operand 0']
    %11 = vsyncpa [#allocation3], 0
    %s12 = scalar_lea.sflag [#allocation3], 1
    %13 = vsyncpa %s12, 0
    %14 = vsyncpa [#allocation6], 0
    %15 = vsyncpa [#allocation4], 0
    %s16 = scalar_lea.sflag [#allocation4], 1
    %17 = vsyncpa %s16, 0
    loop: start=0, step=1, limit=4
    $region2: #{tpu_custom_call.1} parent=1 // loop_pre_header
      _
    $region3: #{tpu_custom_call.1} parent=1 // loop_header
      %s19 = sphi 0, %s23
      %p20 = scmp.ge.s32.totalorder %s19, 4
      %s29 = sphi 0, %s31
      %s32 = sphi 0, %s29
      %s33 = sphi 0, %s32
      %s49 = sphi 0, %s33
      %s53 = sphi 0, %s53
      %s55 = sphi 0, %s53
      %s56 = sphi 0, %s55
      %s70 = sphi 0, %s56
      %s74 = sphi 0, %s74
      %s76 = sphi 0, %s74
      %s77 = sphi 0, %s76
      %s91 = sphi 0, %s77
      %s95 = sphi 0, %s95
      %s97 = sphi 0, %s95
      %s98 = sphi 0, %s97
      %s112 = sphi 0, %s98
      %s116 = sphi 0, %s116
      %s118 = sphi 0, %s116
      %s119 = sphi 0, %s118
      %s133 = sphi 0, %s119
      %s137 = sphi 0, %s137
      %s139 = sphi 0, %s137
      %s140 = sphi 0, %s139
      %s154 = sphi 0, %s140
      %s160 = sphi 0, %s162
      %s163 = sphi 0, %s160
      %s164 = sphi 0, %s163
      %s180 = sphi 0, %s164
    $region4: #{tpu_custom_call.1} parent=1 // loop_header_branch
      %22 = sbr.rel (%p20) target = $region8
    $region5: #{tpu_custom_call.1} parent=1 // loop_body
      %s24 = ssub.s32 %s19, 1
      %s25 = ssub.s32 %s19, 2
      %s26 = sadd.s32 %s19, 1
      %s27 = ssub.s32 %s19, %s26
      %p28 = scmp.eq.s32.totalorder %s27, 0
      %s30 = sadd.s32 %s29, 1
      %s31 = scalar_select %p28, %s29, %s30
      %p34 = pneg %p28
      %p35 = scmp.eq.s32.totalorder %s19, 1
      %p36 = por %p34, %p35
      %p37 = scmp.ne.s32.totalorder %s29, %s32
      %p38 = scmp.eq.s32.totalorder %s19, 0
      %p39 = por %p37, %p38
      %p40 = scmp.ne.s32.totalorder %s29, %s32
      %p41 = scmp.eq.s32.totalorder %s24, 1
      %p42 = por %p40, %p41
      %p43 = scmp.ne.s32.totalorder %s32, %s33
      %p44 = scmp.eq.s32.totalorder %s24, 0
      %p45 = por %p43, %p44
      %p46 = scmp.ne.s32.totalorder %s32, %s33
      %p47 = scmp.eq.s32.totalorder %s25, 1
      %p48 = por %p46, %p47
      %p50 = scmp.ne.s32.totalorder %s33, %s49
      %p51 = scmp.eq.s32.totalorder %s25, 0
      %p52 = por %p50, %p51
      %s54 = sadd.s32 %s53, 1
      %p57 = scmp.eq.s32.totalorder %s19, 1
      %p58 = scmp.ne.s32.totalorder %s53, %s55
      %p59 = scmp.eq.s32.totalorder %s19, 0
      %p60 = por %p58, %p59
      %p61 = scmp.ne.s32.totalorder %s53, %s55
      %p62 = scmp.eq.s32.totalorder %s24, 1
      %p63 = por %p61, %p62
      %p64 = scmp.ne.s32.totalorder %s55, %s56
      %p65 = scmp.eq.s32.totalorder %s24, 0
      %p66 = por %p64, %p65
      %p67 = scmp.ne.s32.totalorder %s55, %s56
      %p68 = scmp.eq.s32.totalorder %s25, 1
      %p69 = por %p67, %p68
      %p71 = scmp.ne.s32.totalorder %s56, %s70
      %p72 = scmp.eq.s32.totalorder %s25, 0
      %p73 = por %p71, %p72
      %s75 = sadd.s32 %s74, 1
      %p78 = scmp.eq.s32.totalorder %s19, 1
      %p79 = scmp.ne.s32.totalorder %s74, %s76
      %p80 = scmp.eq.s32.totalorder %s19, 0
      %p81 = por %p79, %p80
      %p82 = scmp.ne.s32.totalorder %s74, %s76
      %p83 = scmp.eq.s32.totalorder %s24, 1
      %p84 = por %p82, %p83
      %p85 = scmp.ne.s32.totalorder %s76, %s77
      %p86 = scmp.eq.s32.totalorder %s24, 0
      %p87 = por %p85, %p86
      %p88 = scmp.ne.s32.totalorder %s76, %s77
      %p89 = scmp.eq.s32.totalorder %s25, 1
      %p90 = por %p88, %p89
      %p92 = scmp.ne.s32.totalorder %s77, %s91
      %p93 = scmp.eq.s32.totalorder %s25, 0
      %p94 = por %p92, %p93
      %s96 = sadd.s32 %s95, 1
      %p99 = scmp.eq.s32.totalorder %s19, 1
      %p100 = scmp.ne.s32.totalorder %s95, %s97
      %p101 = scmp.eq.s32.totalorder %s19, 0
      %p102 = por %p100, %p101
      %p103 = scmp.ne.s32.totalorder %s95, %s97
      %p104 = scmp.eq.s32.totalorder %s24, 1
      %p105 = por %p103, %p104
      %p106 = scmp.ne.s32.totalorder %s97, %s98
      %p107 = scmp.eq.s32.totalorder %s24, 0
      %p108 = por %p106, %p107
      %p109 = scmp.ne.s32.totalorder %s97, %s98
      %p110 = scmp.eq.s32.totalorder %s25, 1
      %p111 = por %p109, %p110
      %p113 = scmp.ne.s32.totalorder %s98, %s112
      %p114 = scmp.eq.s32.totalorder %s25, 0
      %p115 = por %p113, %p114
      %s117 = sadd.s32 %s116, 1
      %p120 = scmp.eq.s32.totalorder %s19, 1
      %p121 = scmp.ne.s32.totalorder %s116, %s118
      %p122 = scmp.eq.s32.totalorder %s19, 0
      %p123 = por %p121, %p122
      %p124 = scmp.ne.s32.totalorder %s116, %s118
      %p125 = scmp.eq.s32.totalorder %s24, 1
      %p126 = por %p124, %p125
      %p127 = scmp.ne.s32.totalorder %s118, %s119
      %p128 = scmp.eq.s32.totalorder %s24, 0
      %p129 = por %p127, %p128
      %p130 = scmp.ne.s32.totalorder %s118, %s119
      %p131 = scmp.eq.s32.totalorder %s25, 1
      %p132 = por %p130, %p131
      %p134 = scmp.ne.s32.totalorder %s119, %s133
      %p135 = scmp.eq.s32.totalorder %s25, 0
      %p136 = por %p134, %p135
      %s138 = sadd.s32 %s137, 1
      %p141 = scmp.eq.s32.totalorder %s19, 1
      %p142 = scmp.ne.s32.totalorder %s137, %s139
      %p143 = scmp.eq.s32.totalorder %s19, 0
      %p144 = por %p142, %p143
      %p145 = scmp.ne.s32.totalorder %s137, %s139
      %p146 = scmp.eq.s32.totalorder %s24, 1
      %p147 = por %p145, %p146
      %p148 = scmp.ne.s32.totalorder %s139, %s140
      %p149 = scmp.eq.s32.totalorder %s24, 0
      %p150 = por %p148, %p149
      %p151 = scmp.ne.s32.totalorder %s139, %s140
      %p152 = scmp.eq.s32.totalorder %s25, 1
      %p153 = por %p151, %p152
      %p155 = scmp.ne.s32.totalorder %s140, %s154
      %p156 = scmp.eq.s32.totalorder %s25, 0
      %p157 = por %p155, %p156
      %s158 = ssub.s32 %s19, %s26
      %p159 = scmp.eq.s32.totalorder %s158, 0
      %s161 = sadd.s32 %s160, 1
      %s162 = scalar_select %p159, %s160, %s161
      %p165 = pneg %p159
      %p166 = scmp.eq.s32.totalorder %s19, 1
      %p167 = por %p165, %p166
      %p168 = scmp.ne.s32.totalorder %s160, %s163
      %p169 = scmp.eq.s32.totalorder %s19, 0
      %p170 = por %p168, %p169
      %p171 = scmp.ne.s32.totalorder %s160, %s163
      %p172 = scmp.eq.s32.totalorder %s24, 1
      %p173 = por %p171, %p172
      %p174 = scmp.ne.s32.totalorder %s163, %s164
      %p175 = scmp.eq.s32.totalorder %s24, 0
      %p176 = por %p174, %p175
      %p177 = scmp.ne.s32.totalorder %s163, %s164
      %p178 = scmp.eq.s32.totalorder %s25, 1
      %p179 = por %p177, %p178
      %p181 = scmp.ne.s32.totalorder %s164, %s180
      %p182 = scmp.eq.s32.totalorder %s25, 0
      %p183 = por %p181, %p182
      %p184 = scmp.le.s32.totalorder 1, %s19
      %p185 = scmp.lt.s32.totalorder %s19, 3
      %p186 = pnand %p184, %p185
      %p187 = pneg %p186
      // Predicated region
      $region9: #{tpu_custom_call.1} parent=5 // pred_check
        _
      $region10: #{tpu_custom_call.1} parent=5 // pred_check_branch
        %189 = sbr.rel (%p186) target = $region12
      $region11: #{tpu_custom_call.1} parent=5 // pred_region
        %s190 = ssub.s32 %s19, 1
        // Predicated region
        $region13: #{tpu_custom_call.1} parent=11 // pred_check
          %p191 = pneg %p66
        $region14: #{tpu_custom_call.1} parent=11 // pred_check_branch
          %193 = sbr.rel (%p191) target = $region16
        $region15: #{tpu_custom_call.1} parent=11 // pred_region
          _
        $region16: #{tpu_custom_call.1} parent=11 // pred_fallthru
          _
        // Predicated region
        $region17: #{tpu_custom_call.1} parent=11 // pred_check
          %p194 = pneg %p87
        $region18: #{tpu_custom_call.1} parent=11 // pred_check_branch
          %196 = sbr.rel (%p194) target = $region20
        $region19: #{tpu_custom_call.1} parent=11 // pred_region
          _
        $region20: #{tpu_custom_call.1} parent=11 // pred_fallthru
          _
        // Predicated region
        $region21: #{tpu_custom_call.1} parent=11 // pred_check
          %p197 = pneg %p108
        $region22: #{tpu_custom_call.1} parent=11 // pred_check_branch
          %199 = sbr.rel (%p197) target = $region24
        $region23: #{tpu_custom_call.1} parent=11 // pred_region
          %201 = vsyncadd [#allocation6], 0
          %s203 = sshll.u32 %s3, 4
          %s204 = int_to_ptr.hbm [resolvable:$true] %s203
          %s205 = sshll.u32 [#allocation5], 4
          %s206 = int_to_ptr.vmem [resolvable:$true] %s205
          %208 = dma.hbm_to_vmem [thread:$0]  %s204, 128, %s206, [#allocation6]
        $region24: #{tpu_custom_call.1} parent=11 // pred_fallthru
          _
        // Predicated region
        $region25: #{tpu_custom_call.1} parent=11 // pred_check
          %p209 = pneg %p129
        $region26: #{tpu_custom_call.1} parent=11 // pred_check_branch
          %211 = sbr.rel (%p209) target = $region28
        $region27: #{tpu_custom_call.1} parent=11 // pred_region
          %213 = vsyncadd [#allocation6], 0
          %s215 = sshll.u32 %s4, 4
          %s216 = int_to_ptr.hbm [resolvable:$true] %s215
          %s217 = sshll.u32 [#allocation7], 4
          %s218 = int_to_ptr.vmem [resolvable:$true] %s217
          %220 = dma.hbm_to_vmem [thread:$0]  %s216, 64, %s218, [#allocation6]
        $region28: #{tpu_custom_call.1} parent=11 // pred_fallthru
          _
        // Predicated region
        $region29: #{tpu_custom_call.1} parent=11 // pred_check
          %p221 = pneg %p150
        $region30: #{tpu_custom_call.1} parent=11 // pred_check_branch
          %223 = sbr.rel (%p221) target = $region32
        $region31: #{tpu_custom_call.1} parent=11 // pred_region
          _
        $region32: #{tpu_custom_call.1} parent=11 // pred_fallthru
          _
      $region12: #{tpu_custom_call.1} parent=5 // pred_fallthru
        _
      %p224 = scmp.lt.s32.totalorder %s19, 2
      // Predicated region
      $region33: #{tpu_custom_call.1} parent=5 // pred_check
        %p225 = pneg %p224
      $region34: #{tpu_custom_call.1} parent=5 // pred_check_branch
        %227 = sbr.rel (%p225) target = $region36
      $region35: #{tpu_custom_call.1} parent=5 // pred_region
        // Predicated region
        $region37: #{tpu_custom_call.1} parent=35 // pred_check
          %p228 = pneg %p39
        $region38: #{tpu_custom_call.1} parent=35 // pred_check_branch
          %230 = sbr.rel (%p228) target = $region40
        $region39: #{tpu_custom_call.1} parent=35 // pred_region
          %s231 = sand.u32 %s29, 1
          %s232 = scalar_lea.sflag [#allocation3], %s231
          %s233 = sand.u32 %s29, 1
          %s234 = smul.addr %s233, 112
          %s235 = scalar_lea.vmem [#allocation2], %s234
          %237 = vsyncadd %s232, 0
          %s238 = smul.addr %s19, 14
          %s239 = smul.addr %s238, 8
          %s240 = scalar_lea.hbm %s0, %s239
          %s241 = sshll.u32 %s240, 4
          %s242 = int_to_ptr.hbm [resolvable:$true] %s241
          %s243 = sshll.u32 %s235, 4
          %s244 = int_to_ptr.vmem [resolvable:$true] %s243
          %249 = dma.hbm_to_vmem [thread:$0]  %s242, 1792, %s244, %s232, 896, 896, 56
        $region40: #{tpu_custom_call.1} parent=35 // pred_fallthru
          _
      $region36: #{tpu_custom_call.1} parent=5 // pred_fallthru
        _
      %p250 = scmp.le.s32.totalorder 1, %s19
      %p251 = scmp.lt.s32.totalorder %s19, 3
      %p252 = pnand %p250, %p251
      %p253 = pneg %p252
      // Predicated region
      $region41: #{tpu_custom_call.1} parent=5 // pred_check
        _
      $region42: #{tpu_custom_call.1} parent=5 // pred_check_branch
        %255 = sbr.rel (%p252) target = $region44
      $region43: #{tpu_custom_call.1} parent=5 // pred_region
        %s256 = ssub.s32 %s19, 1
        %s257 = sand.u32 %s32, 1
        %s258 = scalar_lea.sflag [#allocation3], %s257
        %s259 = sand.u32 %s32, 1
        %s260 = smul.addr %s259, 112
        %s261 = scalar_lea.vmem [#allocation2], %s260
        // Predicated region
        $region45: #{tpu_custom_call.1} parent=43 // pred_check
          %p262 = pneg %p45
        $region46: #{tpu_custom_call.1} parent=43 // pred_check_branch
          %264 = sbr.rel (%p262) target = $region48
        $region47: #{tpu_custom_call.1} parent=43 // pred_region
          %266 = dma.done %s258, 1792
        $region48: #{tpu_custom_call.1} parent=43 // pred_fallthru
          _
        // Predicated region
        $region49: #{tpu_custom_call.1} parent=43 // pred_check
          %p267 = pneg %p108
        $region50: #{tpu_custom_call.1} parent=43 // pred_check_branch
          %269 = sbr.rel (%p267) target = $region52
        $region51: #{tpu_custom_call.1} parent=43 // pred_region
          %271 = dma.done [#allocation6], 128
        $region52: #{tpu_custom_call.1} parent=43 // pred_fallthru
          _
        // Predicated region
        $region53: #{tpu_custom_call.1} parent=43 // pred_check
          %p272 = pneg %p129
        $region54: #{tpu_custom_call.1} parent=43 // pred_check_branch
          %274 = sbr.rel (%p272) target = $region56
        $region55: #{tpu_custom_call.1} parent=43 // pred_region
          %276 = dma.done [#allocation6], 64
        $region56: #{tpu_custom_call.1} parent=43 // pred_fallthru
          _
        %s277 = sand.u32 %s32, 1
        %s278 = scalar_lea.sflag [#allocation3], %s277
        %s279 = sand.u32 %s32, 1
        %s280 = smul.addr %s279, 112
        %s281 = scalar_lea.vmem [#allocation2], %s280
        %p282 = pneg %p45
        %p283 = pneg %p42
        %p284 = pneg %p66
        %p285 = pneg %p63
        %p286 = pneg %p87
        %p287 = pneg %p84
        %p288 = pneg %p108
        %p289 = pneg %p105
        %p290 = pneg %p129
        %p291 = pneg %p126
        %p292 = pneg %p150
        %p293 = pneg %p147
        %p294 = pneg %p176
        %p295 = pneg %p173
        %s296 = sand.u32 %s163, 1
        %s297 = scalar_lea.sflag [#allocation4], %s296
        %s298 = sand.u32 %s163, 1
        %s299 = smul.addr %s298, 96
        %s300 = scalar_lea.vmem [#allocation8], %s299
        %v301 = vld [vmem:[%s261] sm:$0xff]
        %v302 = vld [vmem:[%s261 + $0x8] sm:$0xff]
        %v303 = vld [vmem:[%s261 + $0x10] sm:$0xff]
        %v304 = vld [vmem:[%s261 + $0x18] sm:$0xff]
        %v305 = vld [vmem:[%s261 + $0x20] sm:$0xff]
        %v306 = vld [vmem:[%s261 + $0x28] sm:$0xff]
        %v307 = vld [vmem:[%s261 + $0x30] sm:$0xff]
        %v308 = vld [vmem:[%s261 + $0x38] sm:$0xff]
        %v309 = vld [vmem:[%s261 + $0x40] sm:$0xff]
        %v310 = vld [vmem:[%s261 + $0x48] sm:$0xff]
        %v311 = vld [vmem:[%s261 + $0x50] sm:$0xff]
        %v312 = vld [vmem:[%s261 + $0x58] sm:$0xff]
        %v313 = vld [vmem:[%s261 + $0x60] sm:$0xff]
        %v314 = vld [vmem:[%s261 + $0x68] sm:$0xff]
        %v315 = vld [vmem:[%s1] ss:$2 sm:$0x7f]
        %s316 = scalar_lea.vmem %s1, 1
        %v317 = vld [vmem:[%s316] ss:$2 sm:$0x7f]
        %v318 = vld [vmem:[%s2] sm:$0xff]
        %v319 = vld [vmem:[%s5] sm:$0xff]
        %321 = vset.pattern.permute.xlu0 0
        %322 = vperm.xlu0 %321, %v319
        %v323 = vpop.permute.xlu0 %322
        %vm325 = vcmask 130048
        %v327 = vsel %vm325, %v318, 0
        %329 = vmatpush.msra.mxu0 0.0
        %330 = vmatpush.msra.mxu0 0.0
        %331 = vmatpush.msra.mxu0 0.0
        %332 = vmatpush.msra.mxu0 0.0
        %333 = vmatpush.msra.mxu0 0.0
        %334 = vmatpush.msra.mxu0 0.0
        %335 = vmatpush.msra.mxu0 0.0
        %336 = vmatpush.msra.mxu0 0.0
        %337 = vmatpush.msra.mxu0 0.0
        %338 = vmatpush.msra.mxu0 0.0
        %339 = vmatpush.msra.mxu0 0.0
        %340 = vmatpush.msra.mxu0 0.0
        %341 = vmatpush.msra.mxu0 0.0
        %342 = vmatpush.msra.mxu0 0.0
        %343 = vmatpush.msra.mxu0 %v308
        %344 = vmatpush.msra.mxu0 %v301
        %345 = vmatmul.f32.gmra.mxu0 %v327
        %v346 = vpop.f32.mrf.mxu0
        %v347 = vadd.f32 %v323, %v346
        %348 = vdwg.mxu0
        %349 = vmatpush.msra.mxu0 0.0
        %350 = vmatpush.msra.mxu0 0.0
        %351 = vmatpush.msra.mxu0 0.0
        %352 = vmatpush.msra.mxu0 0.0
        %353 = vmatpush.msra.mxu0 0.0
        %354 = vmatpush.msra.mxu0 0.0
        %355 = vmatpush.msra.mxu0 0.0
        %356 = vmatpush.msra.mxu0 0.0
        %357 = vmatpush.msra.mxu0 0.0
        %358 = vmatpush.msra.mxu0 0.0
        %359 = vmatpush.msra.mxu0 0.0
        %360 = vmatpush.msra.mxu0 0.0
        %361 = vmatpush.msra.mxu0 0.0
        %362 = vmatpush.msra.mxu0 0.0
        %363 = vmatpush.msra.mxu0 %v309
        %364 = vmatpush.msra.mxu0 %v302
        %365 = vmatmul.f32.gmra.mxu0 %v327
        %v366 = vpop.f32.mrf.mxu0
        %v367 = vadd.f32 %v323, %v366
        %368 = vdwg.mxu0
        %369 = vmatpush.msra.mxu0 0.0
        %370 = vmatpush.msra.mxu0 0.0
        %371 = vmatpush.msra.mxu0 0.0
        %372 = vmatpush.msra.mxu0 0.0
        %373 = vmatpush.msra.mxu0 0.0
        %374 = vmatpush.msra.mxu0 0.0
        %375 = vmatpush.msra.mxu0 0.0
        %376 = vmatpush.msra.mxu0 0.0
        %377 = vmatpush.msra.mxu0 0.0
        %378 = vmatpush.msra.mxu0 0.0
        %379 = vmatpush.msra.mxu0 0.0
        %380 = vmatpush.msra.mxu0 0.0
        %381 = vmatpush.msra.mxu0 0.0
        %382 = vmatpush.msra.mxu0 0.0
        %383 = vmatpush.msra.mxu0 %v310
        %384 = vmatpush.msra.mxu0 %v303
        %385 = vmatmul.f32.gmra.mxu0 %v327
        %v386 = vpop.f32.mrf.mxu0
        %v387 = vadd.f32 %v323, %v386
        %388 = vdwg.mxu0
        %389 = vmatpush.msra.mxu0 0.0
        %390 = vmatpush.msra.mxu0 0.0
        %391 = vmatpush.msra.mxu0 0.0
        %392 = vmatpush.msra.mxu0 0.0
        %393 = vmatpush.msra.mxu0 0.0
        %394 = vmatpush.msra.mxu0 0.0
        %395 = vmatpush.msra.mxu0 0.0
        %396 = vmatpush.msra.mxu0 0.0
        %397 = vmatpush.msra.mxu0 0.0
        %398 = vmatpush.msra.mxu0 0.0
        %399 = vmatpush.msra.mxu0 0.0
        %400 = vmatpush.msra.mxu0 0.0
        %401 = vmatpush.msra.mxu0 0.0
        %402 = vmatpush.msra.mxu0 0.0
        %403 = vmatpush.msra.mxu0 %v311
        %404 = vmatpush.msra.mxu0 %v304
        %405 = vmatmul.f32.gmra.mxu0 %v327
        %v406 = vpop.f32.mrf.mxu0
        %v407 = vadd.f32 %v323, %v406
        %408 = vdwg.mxu0
        %409 = vmatpush.msra.mxu0 0.0
        %410 = vmatpush.msra.mxu0 0.0
        %411 = vmatpush.msra.mxu0 0.0
        %412 = vmatpush.msra.mxu0 0.0
        %413 = vmatpush.msra.mxu0 0.0
        %414 = vmatpush.msra.mxu0 0.0
        %415 = vmatpush.msra.mxu0 0.0
        %416 = vmatpush.msra.mxu0 0.0
        %417 = vmatpush.msra.mxu0 0.0
        %418 = vmatpush.msra.mxu0 0.0
        %419 = vmatpush.msra.mxu0 0.0
        %420 = vmatpush.msra.mxu0 0.0
        %421 = vmatpush.msra.mxu0 0.0
        %422 = vmatpush.msra.mxu0 0.0
        %423 = vmatpush.msra.mxu0 %v312
        %424 = vmatpush.msra.mxu0 %v305
        %425 = vmatmul.f32.gmra.mxu0 %v327
        %v426 = vpop.f32.mrf.mxu0
        %v427 = vadd.f32 %v323, %v426
        %428 = vdwg.mxu0
        %429 = vmatpush.msra.mxu0 0.0
        %430 = vmatpush.msra.mxu0 0.0
        %431 = vmatpush.msra.mxu0 0.0
        %432 = vmatpush.msra.mxu0 0.0
        %433 = vmatpush.msra.mxu0 0.0
        %434 = vmatpush.msra.mxu0 0.0
        %435 = vmatpush.msra.mxu0 0.0
        %436 = vmatpush.msra.mxu0 0.0
        %437 = vmatpush.msra.mxu0 0.0
        %438 = vmatpush.msra.mxu0 0.0
        %439 = vmatpush.msra.mxu0 0.0
        %440 = vmatpush.msra.mxu0 0.0
        %441 = vmatpush.msra.mxu0 0.0
        %442 = vmatpush.msra.mxu0 0.0
        %443 = vmatpush.msra.mxu0 %v313
        %444 = vmatpush.msra.mxu0 %v306
        %445 = vmatmul.f32.gmra.mxu0 %v327
        %v446 = vpop.f32.mrf.mxu0
        %v447 = vadd.f32 %v323, %v446
        %448 = vdwg.mxu0
        %449 = vmatpush.msra.mxu0 0.0
        %450 = vmatpush.msra.mxu0 0.0
        %451 = vmatpush.msra.mxu0 0.0
        %452 = vmatpush.msra.mxu0 0.0
        %453 = vmatpush.msra.mxu0 0.0
        %454 = vmatpush.msra.mxu0 0.0
        %455 = vmatpush.msra.mxu0 0.0
        %456 = vmatpush.msra.mxu0 0.0
        %457 = vmatpush.msra.mxu0 0.0
        %458 = vmatpush.msra.mxu0 0.0
        %459 = vmatpush.msra.mxu0 0.0
        %460 = vmatpush.msra.mxu0 0.0
        %461 = vmatpush.msra.mxu0 0.0
        %462 = vmatpush.msra.mxu0 0.0
        %463 = vmatpush.msra.mxu0 %v314
        %464 = vmatpush.msra.mxu0 %v307
        %465 = vmatmul.f32.gmra.mxu0 %v327
        %v466 = vpop.f32.mrf.mxu0
        %v467 = vadd.f32 %v323, %v466
        %468 = vdwg.mxu0
        %v469 = vmax.f32 %v347, 0.0
        %v470 = vmax.f32 %v367, 0.0
        %v471 = vmax.f32 %v387, 0.0
        %v472 = vmax.f32 %v407, 0.0
        %v473 = vmax.f32 %v427, 0.0
        %v474 = vmax.f32 %v447, 0.0
        %v475 = vmax.f32 %v467, 0.0
        %v477 = vperm.slane %v315, 0
        %v478 = vperm.slane %v315, 1
        %v479 = vperm.slane %v315, 2
        %v480 = vperm.slane %v315, 3
        %v481 = vperm.slane %v315, 4
        %v482 = vperm.slane %v315, 5
        %v483 = vperm.slane %v315, 6
        %v491 = vmul.f32 %v469, %v477
        %v492 = vmul.f32 %v470, %v478
        %v493 = vmul.f32 %v471, %v479
        %v494 = vmul.f32 %v472, %v480
        %v495 = vmul.f32 %v473, %v481
        %v496 = vmul.f32 %v474, %v482
        %v497 = vmul.f32 %v475, %v483
        %v498 = vld [vmem:[%s5 + $0x8] sm:$0xff]
        %506 = vrot.lane.b32.xlu0 %v491, 127
        %v507 = vpop.permute.xlu0 %506
        %508 = vrot.lane.b32.xlu0 %v492, 127
        %v509 = vpop.permute.xlu0 %508
        %510 = vrot.lane.b32.xlu0 %v493, 127
        %v511 = vpop.permute.xlu0 %510
        %512 = vrot.lane.b32.xlu0 %v494, 127
        %v513 = vpop.permute.xlu0 %512
        %514 = vrot.lane.b32.xlu0 %v495, 127
        %v515 = vpop.permute.xlu0 %514
        %516 = vrot.lane.b32.xlu0 %v496, 127
        %v517 = vpop.permute.xlu0 %516
        %518 = vrot.lane.b32.xlu0 %v497, 127
        %v519 = vpop.permute.xlu0 %518
        %vm520 = vcmask 1039360
        %v521 = vsel %vm520, %v507, %v509
        %v522 = vsel %vm520, %v509, %v511
        %v523 = vsel %vm520, %v511, %v513
        %v524 = vsel %vm520, %v513, %v515
        %v525 = vsel %vm520, %v515, %v517
        %v526 = vsel %vm520, %v517, %v519
        %534 = vrot.lane.b32.xlu0 %v491, 126
        %v535 = vpop.permute.xlu0 %534
        %536 = vrot.lane.b32.xlu0 %v492, 126
        %v537 = vpop.permute.xlu0 %536
        %538 = vrot.lane.b32.xlu0 %v493, 126
        %v539 = vpop.permute.xlu0 %538
        %540 = vrot.lane.b32.xlu0 %v494, 126
        %v541 = vpop.permute.xlu0 %540
        %542 = vrot.lane.b32.xlu0 %v495, 126
        %v543 = vpop.permute.xlu0 %542
        %544 = vrot.lane.b32.xlu0 %v496, 126
        %v545 = vpop.permute.xlu0 %544
        %546 = vrot.lane.b32.xlu0 %v497, 126
        %v547 = vpop.permute.xlu0 %546
        %vm548 = vcmask 1031168
        %v549 = vsel %vm548, %v535, %v537
        %v550 = vsel %vm548, %v537, %v539
        %v551 = vsel %vm548, %v539, %v541
        %v552 = vsel %vm548, %v541, %v543
        %v553 = vsel %vm548, %v543, %v545
        %v554 = vsel %vm548, %v545, %v547
        %562 = vrot.lane.b32.xlu0 %v491, 108
        %v563 = vpop.permute.xlu0 %562
        %564 = vrot.lane.b32.xlu0 %v492, 108
        %v565 = vpop.permute.xlu0 %564
        %566 = vrot.lane.b32.xlu0 %v493, 108
        %v567 = vpop.permute.xlu0 %566
        %568 = vrot.lane.b32.xlu0 %v494, 108
        %v569 = vpop.permute.xlu0 %568
        %570 = vrot.lane.b32.xlu0 %v495, 108
        %v571 = vpop.permute.xlu0 %570
        %572 = vrot.lane.b32.xlu0 %v496, 108
        %v573 = vpop.permute.xlu0 %572
        %574 = vrot.lane.b32.xlu0 %v497, 108
        %v575 = vpop.permute.xlu0 %574
        %vm576 = vcmask 883712
        %v577 = vsel %vm576, %v563, %v565
        %v578 = vsel %vm576, %v565, %v567
        %v579 = vsel %vm576, %v567, %v569
        %v580 = vsel %vm576, %v569, %v571
        %v581 = vsel %vm576, %v571, %v573
        %v582 = vsel %vm576, %v573, %v575
        %590 = vrot.lane.b32.xlu0 %v491, 107
        %v591 = vpop.permute.xlu0 %590
        %592 = vrot.lane.b32.xlu0 %v492, 107
        %v593 = vpop.permute.xlu0 %592
        %594 = vrot.lane.b32.xlu0 %v493, 107
        %v595 = vpop.permute.xlu0 %594
        %596 = vrot.lane.b32.xlu0 %v494, 107
        %v597 = vpop.permute.xlu0 %596
        %598 = vrot.lane.b32.xlu0 %v495, 107
        %v599 = vpop.permute.xlu0 %598
        %600 = vrot.lane.b32.xlu0 %v496, 107
        %v601 = vpop.permute.xlu0 %600
        %602 = vrot.lane.b32.xlu0 %v497, 107
        %v603 = vpop.permute.xlu0 %602
        %vm604 = vcmask 875520
        %v605 = vsel %vm604, %v591, %v593
        %v606 = vsel %vm604, %v593, %v595
        %v607 = vsel %vm604, %v595, %v597
        %v608 = vsel %vm604, %v597, %v599
        %v609 = vsel %vm604, %v599, %v601
        %v610 = vsel %vm604, %v601, %v603
        %618 = vrot.lane.b32.xlu0 %v491, 106
        %v619 = vpop.permute.xlu0 %618
        %620 = vrot.lane.b32.xlu0 %v492, 106
        %v621 = vpop.permute.xlu0 %620
        %622 = vrot.lane.b32.xlu0 %v493, 106
        %v623 = vpop.permute.xlu0 %622
        %624 = vrot.lane.b32.xlu0 %v494, 106
        %v625 = vpop.permute.xlu0 %624
        %626 = vrot.lane.b32.xlu0 %v495, 106
        %v627 = vpop.permute.xlu0 %626
        %628 = vrot.lane.b32.xlu0 %v496, 106
        %v629 = vpop.permute.xlu0 %628
        %630 = vrot.lane.b32.xlu0 %v497, 106
        %v631 = vpop.permute.xlu0 %630
        %vm632 = vcmask 867328
        %v633 = vsel %vm632, %v619, %v621
        %v634 = vsel %vm632, %v621, %v623
        %v635 = vsel %vm632, %v623, %v625
        %v636 = vsel %vm632, %v625, %v627
        %v637 = vsel %vm632, %v627, %v629
        %v638 = vsel %vm632, %v629, %v631
        %646 = vrot.lane.b32.xlu0 %v491, 88
        %v647 = vpop.permute.xlu0 %646
        %648 = vrot.lane.b32.xlu0 %v492, 88
        %v649 = vpop.permute.xlu0 %648
        %650 = vrot.lane.b32.xlu0 %v493, 88
        %v651 = vpop.permute.xlu0 %650
        %652 = vrot.lane.b32.xlu0 %v494, 88
        %v653 = vpop.permute.xlu0 %652
        %654 = vrot.lane.b32.xlu0 %v495, 88
        %v655 = vpop.permute.xlu0 %654
        %656 = vrot.lane.b32.xlu0 %v496, 88
        %v657 = vpop.permute.xlu0 %656
        %658 = vrot.lane.b32.xlu0 %v497, 88
        %v659 = vpop.permute.xlu0 %658
        %vm660 = vcmask 719872
        %v661 = vsel %vm660, %v647, %v649
        %v662 = vsel %vm660, %v649, %v651
        %v663 = vsel %vm660, %v651, %v653
        %v664 = vsel %vm660, %v653, %v655
        %v665 = vsel %vm660, %v655, %v657
        %v666 = vsel %vm660, %v657, %v659
        %674 = vrot.lane.b32.xlu0 %v491, 87
        %v675 = vpop.permute.xlu0 %674
        %676 = vrot.lane.b32.xlu0 %v492, 87
        %v677 = vpop.permute.xlu0 %676
        %678 = vrot.lane.b32.xlu0 %v493, 87
        %v679 = vpop.permute.xlu0 %678
        %680 = vrot.lane.b32.xlu0 %v494, 87
        %v681 = vpop.permute.xlu0 %680
        %682 = vrot.lane.b32.xlu0 %v495, 87
        %v683 = vpop.permute.xlu0 %682
        %684 = vrot.lane.b32.xlu0 %v496, 87
        %v685 = vpop.permute.xlu0 %684
        %686 = vrot.lane.b32.xlu0 %v497, 87
        %v687 = vpop.permute.xlu0 %686
        %vm688 = vcmask 711680
        %v689 = vsel %vm688, %v675, %v677
        %v690 = vsel %vm688, %v677, %v679
        %v691 = vsel %vm688, %v679, %v681
        %v692 = vsel %vm688, %v681, %v683
        %v693 = vsel %vm688, %v683, %v685
        %v694 = vsel %vm688, %v685, %v687
        %702 = vrot.lane.b32.xlu0 %v491, 86
        %v703 = vpop.permute.xlu0 %702
        %704 = vrot.lane.b32.xlu0 %v492, 86
        %v705 = vpop.permute.xlu0 %704
        %706 = vrot.lane.b32.xlu0 %v493, 86
        %v707 = vpop.permute.xlu0 %706
        %708 = vrot.lane.b32.xlu0 %v494, 86
        %v709 = vpop.permute.xlu0 %708
        %710 = vrot.lane.b32.xlu0 %v495, 86
        %v711 = vpop.permute.xlu0 %710
        %712 = vrot.lane.b32.xlu0 %v496, 86
        %v713 = vpop.permute.xlu0 %712
        %714 = vrot.lane.b32.xlu0 %v497, 86
        %v715 = vpop.permute.xlu0 %714
        %vm716 = vcmask 703488
        %v717 = vsel %vm716, %v703, %v705
        %v718 = vsel %vm716, %v705, %v707
        %v719 = vsel %vm716, %v707, %v709
        %v720 = vsel %vm716, %v709, %v711
        %v721 = vsel %vm716, %v711, %v713
        %v722 = vsel %vm716, %v713, %v715
        %v730 = vld [vmem:[#allocation5] sm:$0xff]
        %732 = vset.pattern.permute.xlu0 0
        %733 = vperm.xlu0 %732, %v498
        %v734 = vpop.permute.xlu0 %733
        %vm736 = vcmask 588800
        %v738 = vsel %vm736, %v730, 0
        %740 = vmatpush.msra.mxu0 0.0
        %741 = vmatpush.msra.mxu0 0.0
        %742 = vmatpush.msra.mxu0 0.0
        %743 = vmatpush.msra.mxu0 0.0
        %744 = vmatpush.msra.mxu0 0.0
        %745 = vmatpush.msra.mxu0 0.0
        %746 = vmatpush.msra.mxu0 0.0
        %747 = vmatpush.msra.mxu0 %v717
        %748 = vmatpush.msra.mxu0 %v689
        %749 = vmatpush.msra.mxu0 %v661
        %750 = vmatpush.msra.mxu0 %v633
        %751 = vmatpush.msra.mxu0 %v605
        %752 = vmatpush.msra.mxu0 %v577
        %753 = vmatpush.msra.mxu0 %v549
        %754 = vmatpush.msra.mxu0 %v521
        %755 = vmatpush.msra.mxu0 %v491
        %756 = vmatmul.f32.gmra.mxu0 %v738
        %v757 = vpop.f32.mrf.mxu0
        %v758 = vadd.f32 %v734, %v757
        %759 = vdwg.mxu0
        %760 = vmatpush.msra.mxu0 0.0
        %761 = vmatpush.msra.mxu0 0.0
        %762 = vmatpush.msra.mxu0 0.0
        %763 = vmatpush.msra.mxu0 0.0
        %764 = vmatpush.msra.mxu0 0.0
        %765 = vmatpush.msra.mxu0 0.0
        %766 = vmatpush.msra.mxu0 0.0
        %767 = vmatpush.msra.mxu0 %v718
        %768 = vmatpush.msra.mxu0 %v690
        %769 = vmatpush.msra.mxu0 %v662
        %770 = vmatpush.msra.mxu0 %v634
        %771 = vmatpush.msra.mxu0 %v606
        %772 = vmatpush.msra.mxu0 %v578
        %773 = vmatpush.msra.mxu0 %v550
        %774 = vmatpush.msra.mxu0 %v522
        %775 = vmatpush.msra.mxu0 %v492
        %776 = vmatmul.f32.gmra.mxu0 %v738
        %v777 = vpop.f32.mrf.mxu0
        %v778 = vadd.f32 %v734, %v777
        %779 = vdwg.mxu0
        %780 = vmatpush.msra.mxu0 0.0
        %781 = vmatpush.msra.mxu0 0.0
        %782 = vmatpush.msra.mxu0 0.0
        %783 = vmatpush.msra.mxu0 0.0
        %784 = vmatpush.msra.mxu0 0.0
        %785 = vmatpush.msra.mxu0 0.0
        %786 = vmatpush.msra.mxu0 0.0
        %787 = vmatpush.msra.mxu0 %v719
        %788 = vmatpush.msra.mxu0 %v691
        %789 = vmatpush.msra.mxu0 %v663
        %790 = vmatpush.msra.mxu0 %v635
        %791 = vmatpush.msra.mxu0 %v607
        %792 = vmatpush.msra.mxu0 %v579
        %793 = vmatpush.msra.mxu0 %v551
        %794 = vmatpush.msra.mxu0 %v523
        %795 = vmatpush.msra.mxu0 %v493
        %796 = vmatmul.f32.gmra.mxu0 %v738
        %v797 = vpop.f32.mrf.mxu0
        %v798 = vadd.f32 %v734, %v797
        %799 = vdwg.mxu0
        %800 = vmatpush.msra.mxu0 0.0
        %801 = vmatpush.msra.mxu0 0.0
        %802 = vmatpush.msra.mxu0 0.0
        %803 = vmatpush.msra.mxu0 0.0
        %804 = vmatpush.msra.mxu0 0.0
        %805 = vmatpush.msra.mxu0 0.0
        %806 = vmatpush.msra.mxu0 0.0
        %807 = vmatpush.msra.mxu0 %v720
        %808 = vmatpush.msra.mxu0 %v692
        %809 = vmatpush.msra.mxu0 %v664
        %810 = vmatpush.msra.mxu0 %v636
        %811 = vmatpush.msra.mxu0 %v608
        %812 = vmatpush.msra.mxu0 %v580
        %813 = vmatpush.msra.mxu0 %v552
        %814 = vmatpush.msra.mxu0 %v524
        %815 = vmatpush.msra.mxu0 %v494
        %816 = vmatmul.f32.gmra.mxu0 %v738
        %v817 = vpop.f32.mrf.mxu0
        %v818 = vadd.f32 %v734, %v817
        %819 = vdwg.mxu0
        %820 = vmatpush.msra.mxu0 0.0
        %821 = vmatpush.msra.mxu0 0.0
        %822 = vmatpush.msra.mxu0 0.0
        %823 = vmatpush.msra.mxu0 0.0
        %824 = vmatpush.msra.mxu0 0.0
        %825 = vmatpush.msra.mxu0 0.0
        %826 = vmatpush.msra.mxu0 0.0
        %827 = vmatpush.msra.mxu0 %v721
        %828 = vmatpush.msra.mxu0 %v693
        %829 = vmatpush.msra.mxu0 %v665
        %830 = vmatpush.msra.mxu0 %v637
        %831 = vmatpush.msra.mxu0 %v609
        %832 = vmatpush.msra.mxu0 %v581
        %833 = vmatpush.msra.mxu0 %v553
        %834 = vmatpush.msra.mxu0 %v525
        %835 = vmatpush.msra.mxu0 %v495
        %836 = vmatmul.f32.gmra.mxu0 %v738
        %v837 = vpop.f32.mrf.mxu0
        %v838 = vadd.f32 %v734, %v837
        %839 = vdwg.mxu0
        %840 = vmatpush.msra.mxu0 0.0
        %841 = vmatpush.msra.mxu0 0.0
        %842 = vmatpush.msra.mxu0 0.0
        %843 = vmatpush.msra.mxu0 0.0
        %844 = vmatpush.msra.mxu0 0.0
        %845 = vmatpush.msra.mxu0 0.0
        %846 = vmatpush.msra.mxu0 0.0
        %847 = vmatpush.msra.mxu0 %v722
        %848 = vmatpush.msra.mxu0 %v694
        %849 = vmatpush.msra.mxu0 %v666
        %850 = vmatpush.msra.mxu0 %v638
        %851 = vmatpush.msra.mxu0 %v610
        %852 = vmatpush.msra.mxu0 %v582
        %853 = vmatpush.msra.mxu0 %v554
        %854 = vmatpush.msra.mxu0 %v526
        %855 = vmatpush.msra.mxu0 %v496
        %856 = vmatmul.f32.gmra.mxu0 %v738
        %v857 = vpop.f32.mrf.mxu0
        %v858 = vadd.f32 %v734, %v857
        %859 = vdwg.mxu0
        %860 = vmatpush.msra.mxu0 0.0
        %861 = vmatpush.msra.mxu0 0.0
        %862 = vmatpush.msra.mxu0 0.0
        %863 = vmatpush.msra.mxu0 0.0
        %864 = vmatpush.msra.mxu0 0.0
        %865 = vmatpush.msra.mxu0 0.0
        %866 = vmatpush.msra.mxu0 0.0
        %867 = vmatpush.msra.mxu0 %v715
        %868 = vmatpush.msra.mxu0 %v687
        %869 = vmatpush.msra.mxu0 %v659
        %870 = vmatpush.msra.mxu0 %v631
        %871 = vmatpush.msra.mxu0 %v603
        %872 = vmatpush.msra.mxu0 %v575
        %873 = vmatpush.msra.mxu0 %v547
        %874 = vmatpush.msra.mxu0 %v519
        %875 = vmatpush.msra.mxu0 %v497
        %876 = vmatmul.f32.gmra.mxu0 %v738
        %v877 = vpop.f32.mrf.mxu0
        %v878 = vadd.f32 %v734, %v877
        %879 = vdwg.mxu0
        %v880 = vmax.f32 %v758, 0.0
        %v881 = vmax.f32 %v778, 0.0
        %v882 = vmax.f32 %v798, 0.0
        %v883 = vmax.f32 %v818, 0.0
        %v884 = vmax.f32 %v838, 0.0
        %v885 = vmax.f32 %v858, 0.0
        %v886 = vmax.f32 %v878, 0.0
        %v888 = vperm.slane %v317, 0
        %v889 = vperm.slane %v317, 1
        %v890 = vperm.slane %v317, 2
        %v891 = vperm.slane %v317, 3
        %v892 = vperm.slane %v317, 4
        %v893 = vperm.slane %v317, 5
        %v894 = vperm.slane %v317, 6
        %v902 = vmul.f32 %v880, %v888
        %v903 = vmul.f32 %v881, %v889
        %v904 = vmul.f32 %v882, %v890
        %v905 = vmul.f32 %v883, %v891
        %v906 = vmul.f32 %v884, %v892
        %v907 = vmul.f32 %v885, %v893
        %v908 = vmul.f32 %v886, %v894
        %v909 = vld [vmem:[%s5 + $0x10] sm:$0xf]
        %917 = vrot.lane.b32.xlu0 %v902, 127
        %v918 = vpop.permute.xlu0 %917
        %919 = vrot.lane.b32.xlu0 %v903, 127
        %v920 = vpop.permute.xlu0 %919
        %921 = vrot.lane.b32.xlu0 %v904, 127
        %v922 = vpop.permute.xlu0 %921
        %923 = vrot.lane.b32.xlu0 %v905, 127
        %v924 = vpop.permute.xlu0 %923
        %925 = vrot.lane.b32.xlu0 %v906, 127
        %v926 = vpop.permute.xlu0 %925
        %927 = vrot.lane.b32.xlu0 %v907, 127
        %v928 = vpop.permute.xlu0 %927
        %929 = vrot.lane.b32.xlu0 %v908, 127
        %v930 = vpop.permute.xlu0 %929
        %v931 = vsel %vm520, %v918, %v920
        %v932 = vsel %vm520, %v920, %v922
        %v933 = vsel %vm520, %v922, %v924
        %v934 = vsel %vm520, %v924, %v926
        %v935 = vsel %vm520, %v926, %v928
        %v936 = vsel %vm520, %v928, %v930
        %943 = vrot.lane.b32.xlu0 %v902, 126
        %v944 = vpop.permute.xlu0 %943
        %945 = vrot.lane.b32.xlu0 %v903, 126
        %v946 = vpop.permute.xlu0 %945
        %947 = vrot.lane.b32.xlu0 %v904, 126
        %v948 = vpop.permute.xlu0 %947
        %949 = vrot.lane.b32.xlu0 %v905, 126
        %v950 = vpop.permute.xlu0 %949
        %951 = vrot.lane.b32.xlu0 %v906, 126
        %v952 = vpop.permute.xlu0 %951
        %953 = vrot.lane.b32.xlu0 %v907, 126
        %v954 = vpop.permute.xlu0 %953
        %955 = vrot.lane.b32.xlu0 %v908, 126
        %v956 = vpop.permute.xlu0 %955
        %v957 = vsel %vm548, %v944, %v946
        %v958 = vsel %vm548, %v946, %v948
        %v959 = vsel %vm548, %v948, %v950
        %v960 = vsel %vm548, %v950, %v952
        %v961 = vsel %vm548, %v952, %v954
        %v962 = vsel %vm548, %v954, %v956
        %969 = vrot.lane.b32.xlu0 %v902, 108
        %v970 = vpop.permute.xlu0 %969
        %971 = vrot.lane.b32.xlu0 %v903, 108
        %v972 = vpop.permute.xlu0 %971
        %973 = vrot.lane.b32.xlu0 %v904, 108
        %v974 = vpop.permute.xlu0 %973
        %975 = vrot.lane.b32.xlu0 %v905, 108
        %v976 = vpop.permute.xlu0 %975
        %977 = vrot.lane.b32.xlu0 %v906, 108
        %v978 = vpop.permute.xlu0 %977
        %979 = vrot.lane.b32.xlu0 %v907, 108
        %v980 = vpop.permute.xlu0 %979
        %981 = vrot.lane.b32.xlu0 %v908, 108
        %v982 = vpop.permute.xlu0 %981
        %v983 = vsel %vm576, %v970, %v972
        %v984 = vsel %vm576, %v972, %v974
        %v985 = vsel %vm576, %v974, %v976
        %v986 = vsel %vm576, %v976, %v978
        %v987 = vsel %vm576, %v978, %v980
        %v988 = vsel %vm576, %v980, %v982
        %995 = vrot.lane.b32.xlu0 %v902, 107
        %v996 = vpop.permute.xlu0 %995
        %997 = vrot.lane.b32.xlu0 %v903, 107
        %v998 = vpop.permute.xlu0 %997
        %999 = vrot.lane.b32.xlu0 %v904, 107
        %v1000 = vpop.permute.xlu0 %999
        %1001 = vrot.lane.b32.xlu0 %v905, 107
        %v1002 = vpop.permute.xlu0 %1001
        %1003 = vrot.lane.b32.xlu0 %v906, 107
        %v1004 = vpop.permute.xlu0 %1003
        %1005 = vrot.lane.b32.xlu0 %v907, 107
        %v1006 = vpop.permute.xlu0 %1005
        %1007 = vrot.lane.b32.xlu0 %v908, 107
        %v1008 = vpop.permute.xlu0 %1007
        %v1009 = vsel %vm604, %v996, %v998
        %v1010 = vsel %vm604, %v998, %v1000
        %v1011 = vsel %vm604, %v1000, %v1002
        %v1012 = vsel %vm604, %v1002, %v1004
        %v1013 = vsel %vm604, %v1004, %v1006
        %v1014 = vsel %vm604, %v1006, %v1008
        %1021 = vrot.lane.b32.xlu0 %v902, 106
        %v1022 = vpop.permute.xlu0 %1021
        %1023 = vrot.lane.b32.xlu0 %v903, 106
        %v1024 = vpop.permute.xlu0 %1023
        %1025 = vrot.lane.b32.xlu0 %v904, 106
        %v1026 = vpop.permute.xlu0 %1025
        %1027 = vrot.lane.b32.xlu0 %v905, 106
        %v1028 = vpop.permute.xlu0 %1027
        %1029 = vrot.lane.b32.xlu0 %v906, 106
        %v1030 = vpop.permute.xlu0 %1029
        %1031 = vrot.lane.b32.xlu0 %v907, 106
        %v1032 = vpop.permute.xlu0 %1031
        %1033 = vrot.lane.b32.xlu0 %v908, 106
        %v1034 = vpop.permute.xlu0 %1033
        %v1035 = vsel %vm632, %v1022, %v1024
        %v1036 = vsel %vm632, %v1024, %v1026
        %v1037 = vsel %vm632, %v1026, %v1028
        %v1038 = vsel %vm632, %v1028, %v1030
        %v1039 = vsel %vm632, %v1030, %v1032
        %v1040 = vsel %vm632, %v1032, %v1034
        %1047 = vrot.lane.b32.xlu0 %v902, 88
        %v1048 = vpop.permute.xlu0 %1047
        %1049 = vrot.lane.b32.xlu0 %v903, 88
        %v1050 = vpop.permute.xlu0 %1049
        %1051 = vrot.lane.b32.xlu0 %v904, 88
        %v1052 = vpop.permute.xlu0 %1051
        %1053 = vrot.lane.b32.xlu0 %v905, 88
        %v1054 = vpop.permute.xlu0 %1053
        %1055 = vrot.lane.b32.xlu0 %v906, 88
        %v1056 = vpop.permute.xlu0 %1055
        %1057 = vrot.lane.b32.xlu0 %v907, 88
        %v1058 = vpop.permute.xlu0 %1057
        %1059 = vrot.lane.b32.xlu0 %v908, 88
        %v1060 = vpop.permute.xlu0 %1059
        %v1061 = vsel %vm660, %v1048, %v1050
        %v1062 = vsel %vm660, %v1050, %v1052
        %v1063 = vsel %vm660, %v1052, %v1054
        %v1064 = vsel %vm660, %v1054, %v1056
        %v1065 = vsel %vm660, %v1056, %v1058
        %v1066 = vsel %vm660, %v1058, %v1060
        %1073 = vrot.lane.b32.xlu0 %v902, 87
        %v1074 = vpop.permute.xlu0 %1073
        %1075 = vrot.lane.b32.xlu0 %v903, 87
        %v1076 = vpop.permute.xlu0 %1075
        %1077 = vrot.lane.b32.xlu0 %v904, 87
        %v1078 = vpop.permute.xlu0 %1077
        %1079 = vrot.lane.b32.xlu0 %v905, 87
        %v1080 = vpop.permute.xlu0 %1079
        %1081 = vrot.lane.b32.xlu0 %v906, 87
        %v1082 = vpop.permute.xlu0 %1081
        %1083 = vrot.lane.b32.xlu0 %v907, 87
        %v1084 = vpop.permute.xlu0 %1083
        %1085 = vrot.lane.b32.xlu0 %v908, 87
        %v1086 = vpop.permute.xlu0 %1085
        %v1087 = vsel %vm688, %v1074, %v1076
        %v1088 = vsel %vm688, %v1076, %v1078
        %v1089 = vsel %vm688, %v1078, %v1080
        %v1090 = vsel %vm688, %v1080, %v1082
        %v1091 = vsel %vm688, %v1082, %v1084
        %v1092 = vsel %vm688, %v1084, %v1086
        %1099 = vrot.lane.b32.xlu0 %v902, 86
        %v1100 = vpop.permute.xlu0 %1099
        %1101 = vrot.lane.b32.xlu0 %v903, 86
        %v1102 = vpop.permute.xlu0 %1101
        %1103 = vrot.lane.b32.xlu0 %v904, 86
        %v1104 = vpop.permute.xlu0 %1103
        %1105 = vrot.lane.b32.xlu0 %v905, 86
        %v1106 = vpop.permute.xlu0 %1105
        %1107 = vrot.lane.b32.xlu0 %v906, 86
        %v1108 = vpop.permute.xlu0 %1107
        %1109 = vrot.lane.b32.xlu0 %v907, 86
        %v1110 = vpop.permute.xlu0 %1109
        %1111 = vrot.lane.b32.xlu0 %v908, 86
        %v1112 = vpop.permute.xlu0 %1111
        %v1113 = vsel %vm716, %v1100, %v1102
        %v1114 = vsel %vm716, %v1102, %v1104
        %v1115 = vsel %vm716, %v1104, %v1106
        %v1116 = vsel %vm716, %v1106, %v1108
        %v1117 = vsel %vm716, %v1108, %v1110
        %v1118 = vsel %vm716, %v1110, %v1112
        %v1125 = vld [vmem:[#allocation7] sm:$0xf]
        %1127 = vset.pattern.permute.xlu0 0
        %1128 = vperm.xlu0 %1127, %v909
        %v1129 = vpop.permute.xlu0 %1128
        %v1132 = vsel %vm736, %v1125, 0
        %1134 = vmatpush.msra.mxu0 0.0
        %1135 = vmatpush.msra.mxu0 0.0
        %1136 = vmatpush.msra.mxu0 0.0
        %1137 = vmatpush.msra.mxu0 0.0
        %1138 = vmatpush.msra.mxu0 0.0
        %1139 = vmatpush.msra.mxu0 0.0
        %1140 = vmatpush.msra.mxu0 0.0
        %1141 = vmatpush.msra.mxu0 %v1113
        %1142 = vmatpush.msra.mxu0 %v1087
        %1143 = vmatpush.msra.mxu0 %v1061
        %1144 = vmatpush.msra.mxu0 %v1035
        %1145 = vmatpush.msra.mxu0 %v1009
        %1146 = vmatpush.msra.mxu0 %v983
        %1147 = vmatpush.msra.mxu0 %v957
        %1148 = vmatpush.msra.mxu0 %v931
        %1149 = vmatpush.msra.mxu0 %v902
        %1150 = vmatmul.f32.gmra.mxu0 %v1132
        %v1151 = vpop.f32.mrf.mxu0
        %v1152 = vadd.f32 %v1129, %v1151
        %1153 = vdwg.mxu0
        %1154 = vmatpush.msra.mxu0 0.0
        %1155 = vmatpush.msra.mxu0 0.0
        %1156 = vmatpush.msra.mxu0 0.0
        %1157 = vmatpush.msra.mxu0 0.0
        %1158 = vmatpush.msra.mxu0 0.0
        %1159 = vmatpush.msra.mxu0 0.0
        %1160 = vmatpush.msra.mxu0 0.0
        %1161 = vmatpush.msra.mxu0 %v1114
        %1162 = vmatpush.msra.mxu0 %v1088
        %1163 = vmatpush.msra.mxu0 %v1062
        %1164 = vmatpush.msra.mxu0 %v1036
        %1165 = vmatpush.msra.mxu0 %v1010
        %1166 = vmatpush.msra.mxu0 %v984
        %1167 = vmatpush.msra.mxu0 %v958
        %1168 = vmatpush.msra.mxu0 %v932
        %1169 = vmatpush.msra.mxu0 %v903
        %1170 = vmatmul.f32.gmra.mxu0 %v1132
        %v1171 = vpop.f32.mrf.mxu0
        %v1172 = vadd.f32 %v1129, %v1171
        %1173 = vdwg.mxu0
        %1174 = vmatpush.msra.mxu0 0.0
        %1175 = vmatpush.msra.mxu0 0.0
        %1176 = vmatpush.msra.mxu0 0.0
        %1177 = vmatpush.msra.mxu0 0.0
        %1178 = vmatpush.msra.mxu0 0.0
        %1179 = vmatpush.msra.mxu0 0.0
        %1180 = vmatpush.msra.mxu0 0.0
        %1181 = vmatpush.msra.mxu0 %v1115
        %1182 = vmatpush.msra.mxu0 %v1089
        %1183 = vmatpush.msra.mxu0 %v1063
        %1184 = vmatpush.msra.mxu0 %v1037
        %1185 = vmatpush.msra.mxu0 %v1011
        %1186 = vmatpush.msra.mxu0 %v985
        %1187 = vmatpush.msra.mxu0 %v959
        %1188 = vmatpush.msra.mxu0 %v933
        %1189 = vmatpush.msra.mxu0 %v904
        %1190 = vmatmul.f32.gmra.mxu0 %v1132
        %v1191 = vpop.f32.mrf.mxu0
        %v1192 = vadd.f32 %v1129, %v1191
        %1193 = vdwg.mxu0
        %1194 = vmatpush.msra.mxu0 0.0
        %1195 = vmatpush.msra.mxu0 0.0
        %1196 = vmatpush.msra.mxu0 0.0
        %1197 = vmatpush.msra.mxu0 0.0
        %1198 = vmatpush.msra.mxu0 0.0
        %1199 = vmatpush.msra.mxu0 0.0
        %1200 = vmatpush.msra.mxu0 0.0
        %1201 = vmatpush.msra.mxu0 %v1116
        %1202 = vmatpush.msra.mxu0 %v1090
        %1203 = vmatpush.msra.mxu0 %v1064
        %1204 = vmatpush.msra.mxu0 %v1038
        %1205 = vmatpush.msra.mxu0 %v1012
        %1206 = vmatpush.msra.mxu0 %v986
        %1207 = vmatpush.msra.mxu0 %v960
        %1208 = vmatpush.msra.mxu0 %v934
        %1209 = vmatpush.msra.mxu0 %v905
        %1210 = vmatmul.f32.gmra.mxu0 %v1132
        %v1211 = vpop.f32.mrf.mxu0
        %v1212 = vadd.f32 %v1129, %v1211
        %1213 = vdwg.mxu0
        %1214 = vmatpush.msra.mxu0 0.0
        %1215 = vmatpush.msra.mxu0 0.0
        %1216 = vmatpush.msra.mxu0 0.0
        %1217 = vmatpush.msra.mxu0 0.0
        %1218 = vmatpush.msra.mxu0 0.0
        %1219 = vmatpush.msra.mxu0 0.0
        %1220 = vmatpush.msra.mxu0 0.0
        %1221 = vmatpush.msra.mxu0 %v1117
        %1222 = vmatpush.msra.mxu0 %v1091
        %1223 = vmatpush.msra.mxu0 %v1065
        %1224 = vmatpush.msra.mxu0 %v1039
        %1225 = vmatpush.msra.mxu0 %v1013
        %1226 = vmatpush.msra.mxu0 %v987
        %1227 = vmatpush.msra.mxu0 %v961
        %1228 = vmatpush.msra.mxu0 %v935
        %1229 = vmatpush.msra.mxu0 %v906
        %1230 = vmatmul.f32.gmra.mxu0 %v1132
        %v1231 = vpop.f32.mrf.mxu0
        %v1232 = vadd.f32 %v1129, %v1231
        %1233 = vdwg.mxu0
        %1234 = vmatpush.msra.mxu0 0.0
        %1235 = vmatpush.msra.mxu0 0.0
        %1236 = vmatpush.msra.mxu0 0.0
        %1237 = vmatpush.msra.mxu0 0.0
        %1238 = vmatpush.msra.mxu0 0.0
        %1239 = vmatpush.msra.mxu0 0.0
        %1240 = vmatpush.msra.mxu0 0.0
        %1241 = vmatpush.msra.mxu0 %v1118
        %1242 = vmatpush.msra.mxu0 %v1092
        %1243 = vmatpush.msra.mxu0 %v1066
        %1244 = vmatpush.msra.mxu0 %v1040
        %1245 = vmatpush.msra.mxu0 %v1014
        %1246 = vmatpush.msra.mxu0 %v988
        %1247 = vmatpush.msra.mxu0 %v962
        %1248 = vmatpush.msra.mxu0 %v936
        %1249 = vmatpush.msra.mxu0 %v907
        %1250 = vmatmul.f32.gmra.mxu0 %v1132
        %v1251 = vpop.f32.mrf.mxu0
        %v1252 = vadd.f32 %v1129, %v1251
        %1253 = vdwg.mxu0
        %v1254 = vmax.f32 %v1152, 0.0
        %v1255 = vmax.f32 %v1172, 0.0
        %v1256 = vmax.f32 %v1192, 0.0
        %v1257 = vmax.f32 %v1212, 0.0
        %v1258 = vmax.f32 %v1232, 0.0
        %v1259 = vmax.f32 %v1252, 0.0
        %1260 = vrot.lane.b32.xlu0 %v902, 21
        %v1261 = vpop.permute.xlu0 %1260
        %1262 = vrot.lane.b32.xlu0 %v903, 21
        %v1263 = vpop.permute.xlu0 %1262
        %1264 = vrot.lane.b32.xlu0 %v904, 21
        %v1265 = vpop.permute.xlu0 %1264
        %1266 = vrot.lane.b32.xlu0 %v905, 21
        %v1267 = vpop.permute.xlu0 %1266
        %1268 = vrot.lane.b32.xlu0 %v906, 21
        %v1269 = vpop.permute.xlu0 %1268
        %1270 = vrot.lane.b32.xlu0 %v907, 21
        %v1271 = vpop.permute.xlu0 %1270
        %1272 = vrot.lane.b32.xlu0 %v908, 21
        %v1273 = vpop.permute.xlu0 %1272
        %vm1274 = vcmask 171008
        %v1275 = vsel %vm1274, %v1261, %v1263
        %v1276 = vsel %vm1274, %v1263, %v1265
        %v1277 = vsel %vm1274, %v1265, %v1267
        %v1278 = vsel %vm1274, %v1267, %v1269
        %v1279 = vsel %vm1274, %v1269, %v1271
        %v1280 = vsel %vm1274, %v1271, %v1273
        %v1294 = vrot.slane %v1254, 4
        %v1295 = vrot.slane %v1255, 4
        %v1296 = vrot.slane %v1256, 4
        %v1297 = vrot.slane %v1257, 4
        %v1298 = vrot.slane %v1258, 4
        %v1299 = vrot.slane %v1259, 4
        %1300 = vrot.lane.b32.xlu0 %v1294, 42
        %v1301 = vpop.permute.xlu0 %1300
        %1302 = vrot.lane.b32.xlu0 %v1295, 42
        %v1303 = vpop.permute.xlu0 %1302
        %1304 = vrot.lane.b32.xlu0 %v1296, 42
        %v1305 = vpop.permute.xlu0 %1304
        %1306 = vrot.lane.b32.xlu0 %v1297, 42
        %v1307 = vpop.permute.xlu0 %1306
        %1308 = vrot.lane.b32.xlu0 %v1298, 42
        %v1309 = vpop.permute.xlu0 %1308
        %1310 = vrot.lane.b32.xlu0 %v1299, 42
        %v1311 = vpop.permute.xlu0 %1310
        %vm1312 = vcmask 343040
        %v1313 = vsel %vm1312, %v1301, %v1303
        %v1314 = vsel %vm1312, %v1303, %v1305
        %v1315 = vsel %vm1312, %v1305, %v1307
        %v1316 = vsel %vm1312, %v1307, %v1309
        %v1317 = vsel %vm1312, %v1309, %v1311
        %vm1325 = vcmask 1043456
        %v1326 = vsel %vm1325, %v1261, %v1301
        %v1327 = vsel %vm1325, %v1275, %v1313
        %v1328 = vsel %vm1325, %v1276, %v1314
        %v1329 = vsel %vm1325, %v1277, %v1315
        %v1330 = vsel %vm1325, %v1278, %v1316
        %v1331 = vsel %vm1325, %v1279, %v1317
        %v1332 = vsel %vm1325, %v1280, %v1311
        %v1333 = vadd.f32 %v491, %v301
        %v1334 = vadd.f32 %v492, %v302
        %v1335 = vadd.f32 %v493, %v303
        %v1336 = vadd.f32 %v494, %v304
        %v1337 = vadd.f32 %v495, %v305
        %v1338 = vadd.f32 %v496, %v306
        %v1339 = vadd.f32 %v497, %v307
        %v1340 = vadd.f32 %v1326, %v308
        %v1341 = vadd.f32 %v1327, %v309
        %v1342 = vadd.f32 %v1328, %v310
        %v1343 = vadd.f32 %v1329, %v311
        %v1344 = vadd.f32 %v1330, %v312
        %v1345 = vadd.f32 %v1331, %v313
        %v1346 = vadd.f32 %v1332, %v314
        %1361 = vrot.lane.b32.xlu0 %v1333, 86
        %v1362 = vpop.permute.xlu0 %1361
        %1363 = vrot.lane.b32.xlu0 %v1334, 86
        %v1364 = vpop.permute.xlu0 %1363
        %1365 = vrot.lane.b32.xlu0 %v1335, 86
        %v1366 = vpop.permute.xlu0 %1365
        %1367 = vrot.lane.b32.xlu0 %v1336, 86
        %v1368 = vpop.permute.xlu0 %1367
        %1369 = vrot.lane.b32.xlu0 %v1337, 86
        %v1370 = vpop.permute.xlu0 %1369
        %1371 = vrot.lane.b32.xlu0 %v1338, 86
        %v1372 = vpop.permute.xlu0 %1371
        %1373 = vrot.lane.b32.xlu0 %v1339, 86
        %v1374 = vpop.permute.xlu0 %1373
        %1375 = vrot.lane.b32.xlu0 %v1340, 86
        %v1376 = vpop.permute.xlu0 %1375
        %1377 = vrot.lane.b32.xlu0 %v1341, 86
        %v1378 = vpop.permute.xlu0 %1377
        %1379 = vrot.lane.b32.xlu0 %v1342, 86
        %v1380 = vpop.permute.xlu0 %1379
        %1381 = vrot.lane.b32.xlu0 %v1343, 86
        %v1382 = vpop.permute.xlu0 %1381
        %1383 = vrot.lane.b32.xlu0 %v1344, 86
        %v1384 = vpop.permute.xlu0 %1383
        %1385 = vrot.lane.b32.xlu0 %v1345, 86
        %v1386 = vpop.permute.xlu0 %1385
        %1387 = vrot.lane.b32.xlu0 %v1346, 86
        %v1388 = vpop.permute.xlu0 %1387
        %v1389 = vsel %vm716, %v1362, %v1364
        %v1390 = vsel %vm716, %v1364, %v1366
        %v1391 = vsel %vm716, %v1366, %v1368
        %v1392 = vsel %vm716, %v1368, %v1370
        %v1393 = vsel %vm716, %v1370, %v1372
        %v1394 = vsel %vm716, %v1372, %v1374
        %v1395 = vsel %vm716, %v1376, %v1378
        %v1396 = vsel %vm716, %v1378, %v1380
        %v1397 = vsel %vm716, %v1380, %v1382
        %v1398 = vsel %vm716, %v1382, %v1384
        %v1399 = vsel %vm716, %v1384, %v1386
        %v1400 = vsel %vm716, %v1386, %v1388
        %1413 = vst [vmem:[%s300] sm:$0xff] %v1389
        %1414 = vst [vmem:[%s300 + $0x8] sm:$0xff] %v1390
        %1415 = vst [vmem:[%s300 + $0x10] sm:$0xff] %v1391
        %1416 = vst [vmem:[%s300 + $0x18] sm:$0xff] %v1392
        %1417 = vst [vmem:[%s300 + $0x20] sm:$0xff] %v1393
        %1418 = vst [vmem:[%s300 + $0x28] sm:$0xff] %v1394
        %1419 = vst [vmem:[%s300 + $0x30] sm:$0xff] %v1395
        %1420 = vst [vmem:[%s300 + $0x38] sm:$0xff] %v1396
        %1421 = vst [vmem:[%s300 + $0x40] sm:$0xff] %v1397
        %1422 = vst [vmem:[%s300 + $0x48] sm:$0xff] %v1398
        %1423 = vst [vmem:[%s300 + $0x50] sm:$0xff] %v1399
        %1424 = vst [vmem:[%s300 + $0x58] sm:$0xff] %v1400
        %s1425 = sand.u32 %s163, 1
        %s1426 = scalar_lea.sflag [#allocation4], %s1425
        %s1427 = sand.u32 %s163, 1
        %s1428 = smul.addr %s1427, 96
        %s1429 = scalar_lea.vmem [#allocation8], %s1428
        // Predicated region
        $region57: #{tpu_custom_call.1} parent=43 // pred_check
          %p1430 = pneg %p173
        $region58: #{tpu_custom_call.1} parent=43 // pred_check_branch
          %1432 = sbr.rel (%p1430) target = $region60
        $region59: #{tpu_custom_call.1} parent=43 // pred_region
          %1434 = vsyncadd %s1426, 0
          %s1435 = smul.addr %s24, 12
          %s1436 = smul.addr %s1435, 8
          %s1437 = scalar_lea.hbm %s6, %s1436
          %s1438 = sshll.u32 %s1429, 4
          %s1439 = int_to_ptr.vmem [resolvable:$true] %s1438
          %s1440 = sshll.u32 %s1437, 4
          %s1441 = int_to_ptr.hbm [resolvable:$true] %s1440
          %1446 = dma.vmem_to_hbm [thread:$0]  %s1439, 1536, %s1441, %s1426, 768, 768, 48
        $region60: #{tpu_custom_call.1} parent=43 // pred_fallthru
          _
      $region44: #{tpu_custom_call.1} parent=5 // pred_fallthru
        _
      %p1447 = scmp.le.s32.totalorder 2, %s19
      // Predicated region
      $region61: #{tpu_custom_call.1} parent=5 // pred_check
        %p1448 = pneg %p1447
      $region62: #{tpu_custom_call.1} parent=5 // pred_check_branch
        %1450 = sbr.rel (%p1448) target = $region64
      $region63: #{tpu_custom_call.1} parent=5 // pred_region
        %s1451 = ssub.s32 %s19, 2
        // Predicated region
        $region65: #{tpu_custom_call.1} parent=63 // pred_check
          %p1452 = pneg %p179
        $region66: #{tpu_custom_call.1} parent=63 // pred_check_branch
          %1454 = sbr.rel (%p1452) target = $region68
        $region67: #{tpu_custom_call.1} parent=63 // pred_region
          %s1455 = sand.u32 %s164, 1
          %s1456 = scalar_lea.sflag [#allocation4], %s1455
          %s1457 = sand.u32 %s164, 1
          %s1458 = smul.addr %s1457, 96
          %s1459 = scalar_lea.vmem [#allocation8], %s1458
          %1461 = dma.done %s1456, 1536
        $region68: #{tpu_custom_call.1} parent=63 // pred_fallthru
          _
      $region64: #{tpu_custom_call.1} parent=5 // pred_fallthru
        _
    $region6: #{tpu_custom_call.1} parent=1 // loop_footer
      %s23 = sadd.s32 1, %s19
    $region7: #{tpu_custom_call.1} parent=1 // loop_footer_branch
      %18 = sbr.rel target = $region3
    $region8: #{tpu_custom_call.1} parent=1 // loop_exit
      _
    %1462 = vsyncpa [#allocation3], 1
    %s1463 = scalar_lea.sflag [#allocation3], 1
    %1464 = vsyncpa %s1463, 1
    %1465 = vsyncpa [#allocation6], 1
    %1466 = vsyncpa [#allocation4], 1
    %s1467 = scalar_lea.sflag [#allocation4], 1
    %1468 = vsyncpa %s1467, 1

</llo_original>
